<compile_context>
chip_gen: v7x
topology: tpu7x:2x2x1
jax: 0.10.0
libtpu: 0.0.40
codegen_flags: <defaults>
</compile_context>

<pallas_src>
import math
import jax
import jax.numpy as jnp
from jax.experimental import pallas as pl
from jax.experimental.pallas import tpu as pltpu

# ---- model hyper-parameters (small, consistent with the module) -------------
B = 2            # batch
T = 8            # sequence length
D_IN = 32        # in_size == emb_size (required for residual add)
HIDDEN = 32      # emb_size (attention hidden size)
MLP_SIZE = 64    # mlp_size
NUM_HEAD = 4
DPH = HIDDEN // NUM_HEAD          # 8
BH = B * NUM_HEAD                 # 8   (the single "batch*head" einsum axis)
LN_EPS = 1e-5

# ---- packed-parameter layout: one (PACK_ROWS, 128) f32 buffer ---------------
# rows 0..7   : bias / LayerNorm vectors, one per row (zero-padded to 128)
# rows 8..    : weight matrices, per-(batch, head) re-arranged attention
#               weights first, then the MLP weights.  All offsets 8-aligned.
PACK_COLS = 128
_R_BO, _R_G1, _R_BT1, _R_BM1, _R_BM2, _R_G2, _R_BT2 = 0, 1, 2, 3, 4, 5, 6
_R_WQKV = 8                          # (BH*D_IN,  3*DPH) rows   8..263
_R_BQKV = _R_WQKV + BH * D_IN        # (BH*T,     3*DPH) rows 264..327
_R_WO = _R_BQKV + BH * T             # (BH*DPH,   D_IN ) rows 328..391
_R_W1 = _R_WO + BH * DPH             # (HIDDEN, MLP_SIZE) rows 392..423
_R_W2 = _R_W1 + HIDDEN               # (MLP_SIZE, HIDDEN) rows 424..487
PACK_ROWS = _R_W2 + MLP_SIZE         # 488


def _layernorm(x, gamma, beta):
    mu = jnp.mean(x, axis=-1, keepdims=True)
    var = jnp.mean((x - mu) ** 2, axis=-1, keepdims=True)
    return (x - mu) * jax.lax.rsqrt(var + LN_EPS) * gamma + beta


def _bf16(t):
    return t.astype(jnp.bfloat16)


def encoder_layer_kernel(x_ref, mask_ref, p_ref, o_ref):
    x = x_ref[...]                                   # (B*T, D_IN)  f32
    mask2d = mask_ref[...]                           # (B*T, T)     f32

    # ---- unpack parameters (static slices; row offsets all 8-aligned) -------
    bo = p_ref[_R_BO:_R_BO + 1, 0:D_IN]
    g1 = p_ref[_R_G1:_R_G1 + 1, 0:D_IN]
    bt1 = p_ref[_R_BT1:_R_BT1 + 1, 0:D_IN]
    bm1 = p_ref[_R_BM1:_R_BM1 + 1, 0:MLP_SIZE]
    bm2 = p_ref[_R_BM2:_R_BM2 + 1, 0:HIDDEN]
    g2 = p_ref[_R_G2:_R_G2 + 1, 0:D_IN]
    bt2 = p_ref[_R_BT2:_R_BT2 + 1, 0:D_IN]

    wqkv_s = p_ref[_R_WQKV:_R_WQKV + BH * D_IN, 0:3 * DPH].reshape(BH, D_IN, 3 * DPH)
    bqkv_s = p_ref[_R_BQKV:_R_BQKV + BH * T, 0:3 * DPH].reshape(BH, T, 3 * DPH)
    wo_s = p_ref[_R_WO:_R_WO + BH * DPH, 0:D_IN].reshape(BH, DPH, D_IN)
    w1 = p_ref[_R_W1:_R_W1 + HIDDEN, 0:MLP_SIZE]
    w2 = p_ref[_R_W2:_R_W2 + MLP_SIZE, 0:HIDDEN]

    # ---- self attention: everything batched over the (batch, head) axis -----
    x3 = x.reshape(B, T, D_IN)
    xh = jnp.broadcast_to(x3[:, None], (B, NUM_HEAD, T, D_IN)).reshape(BH, T, D_IN)

    # head-batched QKV projection (q columns pre-scaled by 1/sqrt(DPH) at pack)
    qkvh = jnp.einsum("xti,xio->xto", _bf16(xh), _bf16(wqkv_s),
                      preferred_element_type=jnp.float32) + bqkv_s   # (BH, T, 3*DPH)
    qh = qkvh[:, :, 0:DPH]
    kh = qkvh[:, :, DPH:2 * DPH]
    vh = qkvh[:, :, 2 * DPH:3 * DPH]

    # additive mask bias, computed once and broadcast over heads
    bias = jnp.where(mask2d.reshape(B, T, T) != 0.0, 0.0, jnp.float32(-1e9))
    bias = jnp.broadcast_to(bias[:, None], (B, NUM_HEAD, T, T)).reshape(BH, T, T)

    # one head-batched score matmul + one masked softmax
    s = jnp.einsum("xqd,xkd->xqk", _bf16(qh), _bf16(kh),
                   preferred_element_type=jnp.float32) + bias        # (BH, T, T)
    s = s - jnp.max(s, axis=-1, keepdims=True)
    p = jnp.exp(s)
    p = p / jnp.sum(p, axis=-1, keepdims=True)       # exact divide (units are idle)

    ctx = jnp.einsum("xqk,xkd->xqd", _bf16(p), _bf16(vh),
                     preferred_element_type=jnp.float32)             # (BH, T, DPH)

    # head-batched output projection; merging heads is just a sum over heads
    attn_h = jnp.einsum("xtd,xdo->xto", _bf16(ctx), _bf16(wo_s),
                        preferred_element_type=jnp.float32)          # (BH, T, D_IN)
    attn = jnp.sum(attn_h.reshape(B, NUM_HEAD, T, D_IN), axis=1)     # (B, T, D_IN)
    attn = attn.reshape(B * T, D_IN) + bo

    # ---- residual + layernorm 1 ---------------------------------------------
    h1 = _layernorm(x + attn, g1, bt1)

    # ---- MLP -----------------------------------------------------------------
    m = jnp.dot(_bf16(h1), _bf16(w1), preferred_element_type=jnp.float32) + bm1
    m = jnp.maximum(m, 0.0)
    m = jnp.dot(_bf16(m), _bf16(w2), preferred_element_type=jnp.float32) + bm2

    # ---- residual + layernorm 2 -----------------------------------------------
    o_ref[...] = _layernorm(h1 + m, g2, bt2)


def pack_params(params):
    """Build the single (PACK_ROWS, 128) f32 parameter buffer.  Called ONCE at
    init time (hoisted out of the per-call path)."""
    (wqkv, bqkv, wo, bo, g1, bt1, w1, bm1, w2, bm2, g2, bt2) = params
    scale = 1.0 / math.sqrt(DPH)

    # fold the 1/sqrt(DPH) score scale into the q projection weights / bias
    wq, wk, wv = wqkv[:, :HIDDEN] * scale, wqkv[:, HIDDEN:2 * HIDDEN], wqkv[:, 2 * HIDDEN:]
    bq, bk, bv = bqkv[:, :HIDDEN] * scale, bqkv[:, HIDDEN:2 * HIDDEN], bqkv[:, 2 * HIDDEN:]

    # per-(batch, head) re-arranged attention weights (replicated over batch so
    # the kernel's einsum batch axis is a plain leading dim of size B*NUM_HEAD)
    wqkv_rows, bqkv_rows, wo_rows = [], [], []
    for _b in range(B):
        for h in range(NUM_HEAD):
            sl = slice(h * DPH, (h + 1) * DPH)
            wqkv_rows.append(jnp.concatenate([wq[:, sl], wk[:, sl], wv[:, sl]], axis=1))
            bh = jnp.concatenate([bq[:, sl], bk[:, sl], bv[:, sl]], axis=1)       # (1, 24)
            bqkv_rows.append(jnp.broadcast_to(bh, (T, 3 * DPH)))                  # (T, 24)
            wo_rows.append(wo[sl, :])                                             # (DPH, D_IN)
    wqkv_s = jnp.concatenate(wqkv_rows, axis=0)     # (BH*D_IN, 3*DPH) = (256, 24)
    bqkv_s = jnp.concatenate(bqkv_rows, axis=0)     # (BH*T,    3*DPH) = ( 64, 24)
    wo_s = jnp.concatenate(wo_rows, axis=0)         # (BH*DPH,  D_IN ) = ( 64, 32)

    def pad_cols(a):
        a = jnp.asarray(a, jnp.float32)
        return jnp.pad(a, ((0, 0), (0, PACK_COLS - a.shape[1])))

    blocks = [bo, g1, bt1, bm1, bm2, g2, bt2,
              jnp.zeros((1, PACK_COLS), jnp.float32),      # spare row -> 8-aligned
              wqkv_s, bqkv_s, wo_s, w1, w2]
    pack = jnp.concatenate([pad_cols(blk) for blk in blocks], axis=0)
    assert pack.shape == (PACK_ROWS, PACK_COLS)
    return pack


@jax.jit
def encoder_layer(x, mask, pack):
    """x: (B, T, D_IN) f32, mask: (B, T, T) f32, pack: prebuilt (488, 128) f32.
    Returns a dict like the PyTorch module."""
    x2d = x.reshape(B * T, D_IN)                 # whole batch as one slab
    mask2d = mask.reshape(B * T, T)              # 2-D mask DMA (no padded 3-D block)

    out2d = pl.pallas_call(
        encoder_layer_kernel,
        out_shape=jax.ShapeDtypeStruct((B * T, D_IN), jnp.float32),
        in_specs=[
            pl.BlockSpec(memory_space=pltpu.MemorySpace.VMEM),
            pl.BlockSpec(memory_space=pltpu.MemorySpace.VMEM),
            pl.BlockSpec(memory_space=pltpu.MemorySpace.VMEM),
        ],
        out_specs=pl.BlockSpec(memory_space=pltpu.MemorySpace.VMEM),
    )(x2d, mask2d, pack)
    # TODO(synk): a fully lane-dense output (last dim multiple of 128) only pays
    # off once B*T*D_IN is much larger; keep the natural (B*T, D_IN) store here.
    return {"input": out2d.reshape(B, T, D_IN), "mask": mask}


def init_params(key):
    """Deterministic parameter init (PyTorch-style uniform for linears,
    ones/zeros for LayerNorm)."""
    ks = jax.random.split(key, 8)

    def lin(k, fan_in, fan_out):
        bound = 1.0 / math.sqrt(fan_in)
        kw, kb = jax.random.split(k)
        w = jax.random.uniform(kw, (fan_in, fan_out), jnp.float32, -bound, bound)
        b = jax.random.uniform(kb, (1, fan_out), jnp.float32, -bound, bound)
        return w, b

    wqkv, bqkv = lin(ks[0], D_IN, 3 * HIDDEN)      # SelfAttention.qkv
    wo, bo = lin(ks[1], HIDDEN, D_IN)              # SelfAttention.out_proj
    w1, bm1 = lin(ks[2], HIDDEN, MLP_SIZE)         # MLP layer 1
    w2, bm2 = lin(ks[3], MLP_SIZE, HIDDEN)         # MLP layer 2
    g1 = jnp.ones((1, D_IN), jnp.float32)          # LayerNorm 1 weight
    bt1 = jnp.zeros((1, D_IN), jnp.float32)        # LayerNorm 1 bias
    g2 = jnp.ones((1, D_IN), jnp.float32)          # LayerNorm 2 weight
    bt2 = jnp.zeros((1, D_IN), jnp.float32)        # LayerNorm 2 bias
    return (wqkv, bqkv, wo, bo, g1, bt1, w1, bm1, w2, bm2, g2, bt2)


def reference(x, mask, params):
    """Pure-JAX f32 reference of the same forward, for a sanity check."""
    (wqkv, bqkv, wo, bo, g1, bt1, w1, bm1, w2, bm2, g2, bt2) = params
    qkv = x @ wqkv + bqkv                                 # (B, T, 3H)
    q, k, v = jnp.split(qkv, 3, axis=-1)

    def split_heads(t):  # (B, T, H) -> (B, nh, T, dph)
        return t.reshape(B, T, NUM_HEAD, DPH).transpose(0, 2, 1, 3)

    qh, kh, vh = split_heads(q), split_heads(k), split_heads(v)
    s = jnp.einsum("bhqd,bhkd->bhqk", qh, kh) / math.sqrt(DPH)
    s = jnp.where(mask[:, None, :, :] != 0.0, s, -1e9)
    p = jax.nn.softmax(s, axis=-1)
    a = jnp.einsum("bhqk,bhkd->bhqd", p, vh).transpose(0, 2, 1, 3).reshape(B, T, HIDDEN)
    attn = a @ wo + bo

    def ln(t, g, b):
        mu = jnp.mean(t, -1, keepdims=True)
        var = jnp.mean((t - mu) ** 2, -1, keepdims=True)
        return (t - mu) / jnp.sqrt(var + LN_EPS) * g + b

    h1 = ln(x + attn, g1, bt1)
    m = jnp.maximum(h1 @ w1 + bm1, 0.0) @ w2 + bm2
    return ln(h1 + m, g2, bt2)


if __name__ == "__main__":
    key = jax.random.PRNGKey(0)
    kx, kp = jax.random.split(key)
    x = jax.random.normal(kx, (B, T, D_IN), jnp.float32)
    # mask: 1 = keep, 0 = masked; mask out the last 2 key positions of batch 1.
    mask = jnp.ones((B, T, T), jnp.float32)
    mask = mask.at[1, :, T - 2:].set(0.0)

    params = init_params(kp)
    pack = pack_params(params)          # packed ONCE at init, not per call

    out = encoder_layer(x, mask, pack)
    jax.block_until_ready(out["input"])

    ref = reference(x, mask, params)
    # Tolerance accounts for bf16 MXU operands (f32 accumulation) inside the
    # kernel vs. the all-f32 reference; structural bugs would be far outside.
    assert jnp.allclose(out["input"], ref, atol=2e-2, rtol=2e-2), "mismatch vs reference"
    assert out["input"].shape == (B, T, D_IN)
    assert out["mask"].shape == (B, T, T)
    print("KERNEL_OK")
</pallas_src>

<mosaic_0001>
module attributes {stable_mosaic.version = 11 : i64} {
  func.func @encoder_layer_kernel(%arg0: memref<16x32xf32, #tpu.memory_space<vmem>>, %arg1: memref<16x8xf32, #tpu.memory_space<vmem>>, %arg2: memref<488x128xf32, #tpu.memory_space<vmem>>, %arg3: memref<16x32xf32, #tpu.memory_space<vmem>>) attributes {dimension_semantics = [], scalar_prefetch = 0 : i64, scratch_operands = 0 : i64, tpu.core_type = #tpu.core_type<tc>} {
    %c0 = arith.constant 0 : index
    %c0_0 = arith.constant 0 : index
    %0 = vector.load %arg0[%c0, %c0_0] : memref<16x32xf32, #tpu.memory_space<vmem>>, vector<16x32xf32>
    %c0_1 = arith.constant 0 : index
    %c0_2 = arith.constant 0 : index
    %1 = vector.load %arg1[%c0_1, %c0_2] : memref<16x8xf32, #tpu.memory_space<vmem>>, vector<16x8xf32>
    %c0_3 = arith.constant 0 : index
    %c0_4 = arith.constant 0 : index
    %2 = vector.load %arg2[%c0_3, %c0_4] : memref<488x128xf32, #tpu.memory_space<vmem>>, vector<1x32xf32>
    %c1 = arith.constant 1 : index
    %c0_5 = arith.constant 0 : index
    %3 = vector.load %arg2[%c1, %c0_5] : memref<488x128xf32, #tpu.memory_space<vmem>>, vector<1x32xf32>
    %c2 = arith.constant 2 : index
    %c0_6 = arith.constant 0 : index
    %4 = vector.load %arg2[%c2, %c0_6] : memref<488x128xf32, #tpu.memory_space<vmem>>, vector<1x32xf32>
    %c3 = arith.constant 3 : index
    %c0_7 = arith.constant 0 : index
    %5 = vector.load %arg2[%c3, %c0_7] : memref<488x128xf32, #tpu.memory_space<vmem>>, vector<1x64xf32>
    %c4 = arith.constant 4 : index
    %c0_8 = arith.constant 0 : index
    %6 = vector.load %arg2[%c4, %c0_8] : memref<488x128xf32, #tpu.memory_space<vmem>>, vector<1x32xf32>
    %c5 = arith.constant 5 : index
    %c0_9 = arith.constant 0 : index
    %7 = vector.load %arg2[%c5, %c0_9] : memref<488x128xf32, #tpu.memory_space<vmem>>, vector<1x32xf32>
    %c6 = arith.constant 6 : index
    %c0_10 = arith.constant 0 : index
    %8 = vector.load %arg2[%c6, %c0_10] : memref<488x128xf32, #tpu.memory_space<vmem>>, vector<1x32xf32>
    %c8 = arith.constant 8 : index
    %c0_11 = arith.constant 0 : index
    %9 = vector.load %arg2[%c8, %c0_11] : memref<488x128xf32, #tpu.memory_space<vmem>>, vector<256x24xf32>
    %10 = vector.shape_cast %9 : vector<256x24xf32> to vector<8x32x24xf32>
    %c264 = arith.constant 264 : index
    %c0_12 = arith.constant 0 : index
    %11 = vector.load %arg2[%c264, %c0_12] : memref<488x128xf32, #tpu.memory_space<vmem>>, vector<64x24xf32>
    %12 = vector.shape_cast %11 : vector<64x24xf32> to vector<8x8x24xf32>
    %c328 = arith.constant 328 : index
    %c0_13 = arith.constant 0 : index
    %13 = vector.load %arg2[%c328, %c0_13] : memref<488x128xf32, #tpu.memory_space<vmem>>, vector<64x32xf32>
    %14 = vector.shape_cast %13 : vector<64x32xf32> to vector<8x8x32xf32>
    %c392 = arith.constant 392 : index
    %c0_14 = arith.constant 0 : index
    %15 = vector.load %arg2[%c392, %c0_14] : memref<488x128xf32, #tpu.memory_space<vmem>>, vector<32x64xf32>
    %c424 = arith.constant 424 : index
    %c0_15 = arith.constant 0 : index
    %16 = vector.load %arg2[%c424, %c0_15] : memref<488x128xf32, #tpu.memory_space<vmem>>, vector<64x32xf32>
    %17 = vector.shape_cast %0 : vector<16x32xf32> to vector<2x8x32xf32>
    %18 = vector.shape_cast %17 : vector<2x8x32xf32> to vector<2x1x8x32xf32>
    %19 = vector.shape_cast %18 : vector<2x1x8x32xf32> to vector<2x1x8x32xf32>
    %20 = vector.broadcast %19 : vector<2x1x8x32xf32> to vector<2x4x8x32xf32>
    %21 = vector.shape_cast %20 : vector<2x4x8x32xf32> to vector<8x8x32xf32>
    %22 = arith.truncf %21 : vector<8x8x32xf32> to vector<8x8x32xbf16>
    %23 = arith.truncf %10 : vector<8x32x24xf32> to vector<8x32x24xbf16>
    "tpu.trace_start"() <{level = 10 : i32, message = "xti,xio->xto"}> : () -> ()
    %cst = arith.constant dense<0.000000e+00> : vector<8x8x24xf32>
    %24 = tpu.matmul %22, %23, %cst {dimension_numbers = #tpu.dot_dimension_numbers<[2], [1], [1], [2], [0, 0, 0, 1, 1, 2], [0], [0]>} : vector<8x8x32xbf16>, vector<8x32x24xbf16>, vector<8x8x24xf32> -> vector<8x8x24xf32>
    "tpu.trace_stop"() : () -> ()
    %25 = arith.addf %24, %12 : vector<8x8x24xf32>
    %26 = vector.extract_strided_slice %25 {offsets = [0, 0, 0], sizes = [8, 8, 8], strides = [1, 1, 1]} : vector<8x8x24xf32> to vector<8x8x8xf32>
    %27 = vector.extract_strided_slice %25 {offsets = [0, 0, 8], sizes = [8, 8, 8], strides = [1, 1, 1]} : vector<8x8x24xf32> to vector<8x8x8xf32>
    %28 = vector.extract_strided_slice %25 {offsets = [0, 0, 16], sizes = [8, 8, 8], strides = [1, 1, 1]} : vector<8x8x24xf32> to vector<8x8x8xf32>
    %29 = vector.shape_cast %1 : vector<16x8xf32> to vector<2x8x8xf32>
    %cst_16 = arith.constant 0.000000e+00 : f32
    %30 = vector.broadcast %cst_16 : f32 to vector<2x8x8xf32>
    %31 = arith.cmpf one, %29, %30 : vector<2x8x8xf32>
    %cst_17 = arith.constant 0.000000e+00 : f32
    %cst_18 = arith.constant -1.000000e+09 : f32
    %32 = vector.broadcast %cst_17 : f32 to vector<2x8x8xf32>
    %33 = vector.broadcast %cst_18 : f32 to vector<2x8x8xf32>
    %34 = arith.select %31, %32, %33 : vector<2x8x8xi1>, vector<2x8x8xf32>
    %35 = vector.shape_cast %34 : vector<2x8x8xf32> to vector<2x1x8x8xf32>
    %36 = vector.shape_cast %35 : vector<2x1x8x8xf32> to vector<2x1x8x8xf32>
    %37 = vector.broadcast %36 : vector<2x1x8x8xf32> to vector<2x4x8x8xf32>
    %38 = vector.shape_cast %37 : vector<2x4x8x8xf32> to vector<8x8x8xf32>
    %39 = arith.truncf %26 : vector<8x8x8xf32> to vector<8x8x8xbf16>
    %40 = arith.truncf %27 : vector<8x8x8xf32> to vector<8x8x8xbf16>
    "tpu.trace_start"() <{level = 10 : i32, message = "xqd,xkd->xqk"}> : () -> ()
    %cst_19 = arith.constant dense<0.000000e+00> : vector<8x8x8xf32>
    %41 = tpu.matmul %39, %40, %cst_19 {dimension_numbers = #tpu.dot_dimension_numbers<[2], [2], [1], [1], [0, 0, 0, 1, 1, 1], [0], [0]>} : vector<8x8x8xbf16>, vector<8x8x8xbf16>, vector<8x8x8xf32> -> vector<8x8x8xf32>
    "tpu.trace_stop"() : () -> ()
    %42 = arith.addf %41, %38 : vector<8x8x8xf32>
    %cst_20 = arith.constant dense<0xFF800000> : vector<8x8xf32>
    %43 = vector.multi_reduction <maximumf>, %42, %cst_20 [2] : vector<8x8x8xf32> to vector<8x8xf32>
    %44 = vector.shape_cast %43 : vector<8x8xf32> to vector<8x8x1xf32>
    %45 = vector.broadcast %44 : vector<8x8x1xf32> to vector<8x8x8xf32>
    %46 = arith.subf %42, %45 : vector<8x8x8xf32>
    %47 = math.exp %46 : vector<8x8x8xf32>
    %cst_21 = arith.constant dense<0.000000e+00> : vector<8x8xf32>
    %48 = vector.multi_reduction <add>, %47, %cst_21 [2] : vector<8x8x8xf32> to vector<8x8xf32>
    %49 = vector.shape_cast %48 : vector<8x8xf32> to vector<8x8x1xf32>
    %50 = vector.broadcast %49 : vector<8x8x1xf32> to vector<8x8x8xf32>
    %51 = arith.divf %47, %50 : vector<8x8x8xf32>
    %52 = arith.truncf %51 : vector<8x8x8xf32> to vector<8x8x8xbf16>
    %53 = arith.truncf %28 : vector<8x8x8xf32> to vector<8x8x8xbf16>
    "tpu.trace_start"() <{level = 10 : i32, message = "xqk,xkd->xqd"}> : () -> ()
    %cst_22 = arith.constant dense<0.000000e+00> : vector<8x8x8xf32>
    %54 = tpu.matmul %52, %53, %cst_22 {dimension_numbers = #tpu.dot_dimension_numbers<[2], [1], [1], [2], [0, 0, 0, 1, 1, 2], [0], [0]>} : vector<8x8x8xbf16>, vector<8x8x8xbf16>, vector<8x8x8xf32> -> vector<8x8x8xf32>
    "tpu.trace_stop"() : () -> ()
    %55 = arith.truncf %54 : vector<8x8x8xf32> to vector<8x8x8xbf16>
    %56 = arith.truncf %14 : vector<8x8x32xf32> to vector<8x8x32xbf16>
    "tpu.trace_start"() <{level = 10 : i32, message = "xtd,xdo->xto"}> : () -> ()
    %cst_23 = arith.constant dense<0.000000e+00> : vector<8x8x32xf32>
    %57 = tpu.matmul %55, %56, %cst_23 {dimension_numbers = #tpu.dot_dimension_numbers<[2], [1], [1], [2], [0, 0, 0, 1, 1, 2], [0], [0]>} : vector<8x8x8xbf16>, vector<8x8x32xbf16>, vector<8x8x32xf32> -> vector<8x8x32xf32>
    "tpu.trace_stop"() : () -> ()
    %58 = vector.shape_cast %57 : vector<8x8x32xf32> to vector<2x4x8x32xf32>
    %cst_24 = arith.constant dense<0.000000e+00> : vector<2x8x32xf32>
    %59 = vector.multi_reduction <add>, %58, %cst_24 [1] : vector<2x4x8x32xf32> to vector<2x8x32xf32>
    %60 = vector.shape_cast %59 : vector<2x8x32xf32> to vector<16x32xf32>
    %61 = vector.broadcast %2 : vector<1x32xf32> to vector<16x32xf32>
    %62 = arith.addf %60, %61 : vector<16x32xf32>
    %63 = arith.addf %0, %62 : vector<16x32xf32>
    %cst_25 = arith.constant dense<0.000000e+00> : vector<16xf32>
    %64 = vector.multi_reduction <add>, %63, %cst_25 [1] : vector<16x32xf32> to vector<16xf32>
    %65 = vector.shape_cast %64 : vector<16xf32> to vector<16x1xf32>
    %cst_26 = arith.constant 3.200000e+01 : f32
    %66 = vector.broadcast %cst_26 : f32 to vector<16x1xf32>
    %67 = arith.divf %65, %66 : vector<16x1xf32>
    %68 = vector.broadcast %67 : vector<16x1xf32> to vector<16x32xf32>
    %69 = arith.subf %63, %68 : vector<16x32xf32>
    %70 = arith.mulf %69, %69 : vector<16x32xf32>
    %cst_27 = arith.constant dense<0.000000e+00> : vector<16xf32>
    %71 = vector.multi_reduction <add>, %70, %cst_27 [1] : vector<16x32xf32> to vector<16xf32>
    %72 = vector.shape_cast %71 : vector<16xf32> to vector<16x1xf32>
    %cst_28 = arith.constant 3.200000e+01 : f32
    %73 = vector.broadcast %cst_28 : f32 to vector<16x1xf32>
    %74 = arith.divf %72, %73 : vector<16x1xf32>
    %75 = vector.broadcast %67 : vector<16x1xf32> to vector<16x32xf32>
    %76 = arith.subf %63, %75 : vector<16x32xf32>
    %cst_29 = arith.constant 9.99999974E-6 : f32
    %77 = vector.broadcast %cst_29 : f32 to vector<16x1xf32>
    %78 = arith.addf %74, %77 : vector<16x1xf32>
    %79 = math.rsqrt %78 : vector<16x1xf32>
    %80 = vector.broadcast %79 : vector<16x1xf32> to vector<16x32xf32>
    %81 = arith.mulf %76, %80 : vector<16x32xf32>
    %82 = vector.broadcast %3 : vector<1x32xf32> to vector<16x32xf32>
    %83 = arith.mulf %81, %82 : vector<16x32xf32>
    %84 = vector.broadcast %4 : vector<1x32xf32> to vector<16x32xf32>
    %85 = arith.addf %83, %84 : vector<16x32xf32>
    %86 = arith.truncf %85 : vector<16x32xf32> to vector<16x32xbf16>
    %87 = arith.truncf %15 : vector<32x64xf32> to vector<32x64xbf16>
    %cst_30 = arith.constant dense<0.000000e+00> : vector<16x64xf32>
    %88 = tpu.matmul %86, %87, %cst_30 {dimension_numbers = #tpu.dot_dimension_numbers<[1], [0], [0], [1], [0, 0, 1, 1], [], []>} : vector<16x32xbf16>, vector<32x64xbf16>, vector<16x64xf32> -> vector<16x64xf32>
    %89 = vector.broadcast %5 : vector<1x64xf32> to vector<16x64xf32>
    %90 = arith.addf %88, %89 : vector<16x64xf32>
    %cst_31 = arith.constant 0.000000e+00 : f32
    %91 = vector.broadcast %cst_31 : f32 to vector<16x64xf32>
    %92 = arith.maximumf %90, %91 : vector<16x64xf32>
    %93 = arith.truncf %92 : vector<16x64xf32> to vector<16x64xbf16>
    %94 = arith.truncf %16 : vector<64x32xf32> to vector<64x32xbf16>
    %cst_32 = arith.constant dense<0.000000e+00> : vector<16x32xf32>
    %95 = tpu.matmul %93, %94, %cst_32 {dimension_numbers = #tpu.dot_dimension_numbers<[1], [0], [0], [1], [0, 0, 1, 1], [], []>} : vector<16x64xbf16>, vector<64x32xbf16>, vector<16x32xf32> -> vector<16x32xf32>
    %96 = vector.broadcast %6 : vector<1x32xf32> to vector<16x32xf32>
    %97 = arith.addf %95, %96 : vector<16x32xf32>
    %98 = arith.addf %85, %97 : vector<16x32xf32>
    %cst_33 = arith.constant dense<0.000000e+00> : vector<16xf32>
    %99 = vector.multi_reduction <add>, %98, %cst_33 [1] : vector<16x32xf32> to vector<16xf32>
    %100 = vector.shape_cast %99 : vector<16xf32> to vector<16x1xf32>
    %cst_34 = arith.constant 3.200000e+01 : f32
    %101 = vector.broadcast %cst_34 : f32 to vector<16x1xf32>
    %102 = arith.divf %100, %101 : vector<16x1xf32>
    %103 = vector.broadcast %102 : vector<16x1xf32> to vector<16x32xf32>
    %104 = arith.subf %98, %103 : vector<16x32xf32>
    %105 = arith.mulf %104, %104 : vector<16x32xf32>
    %cst_35 = arith.constant dense<0.000000e+00> : vector<16xf32>
    %106 = vector.multi_reduction <add>, %105, %cst_35 [1] : vector<16x32xf32> to vector<16xf32>
    %107 = vector.shape_cast %106 : vector<16xf32> to vector<16x1xf32>
    %cst_36 = arith.constant 3.200000e+01 : f32
    %108 = vector.broadcast %cst_36 : f32 to vector<16x1xf32>
    %109 = arith.divf %107, %108 : vector<16x1xf32>
    %110 = vector.broadcast %102 : vector<16x1xf32> to vector<16x32xf32>
    %111 = arith.subf %98, %110 : vector<16x32xf32>
    %cst_37 = arith.constant 9.99999974E-6 : f32
    %112 = vector.broadcast %cst_37 : f32 to vector<16x1xf32>
    %113 = arith.addf %109, %112 : vector<16x1xf32>
    %114 = math.rsqrt %113 : vector<16x1xf32>
    %115 = vector.broadcast %114 : vector<16x1xf32> to vector<16x32xf32>
    %116 = arith.mulf %111, %115 : vector<16x32xf32>
    %117 = vector.broadcast %7 : vector<1x32xf32> to vector<16x32xf32>
    %118 = arith.mulf %116, %117 : vector<16x32xf32>
    %119 = vector.broadcast %8 : vector<1x32xf32> to vector<16x32xf32>
    %120 = arith.addf %118, %119 : vector<16x32xf32>
    %c0_38 = arith.constant 0 : index
    %c0_39 = arith.constant 0 : index
    %121 = vector.load %arg3[%c0_38, %c0_39] : memref<16x32xf32, #tpu.memory_space<vmem>>, vector<16x32xf32>
    tpu.vector_store %arg3[%c0_38, %c0_39], %120 {strides = array<i32>} : memref<16x32xf32, #tpu.memory_space<vmem>>, vector<16x32xf32>,
    return
  }
}

</mosaic_0001>

<llo_original>
// kernel: encoder_layer.1
$region0: #{encoder_layer.1}
  #allocation0 [shape = 'u32[]', space=smem, size = 0x4, offset = 0x4, fixed_abs, tag = 'smem constant byte address 0x4 - core index']
  #allocation1 [shape = 'u32[144,128]{1,0:T(1,128)}', space=vmem, size = 0x12000, scoped, tag = 'internal scratch']
  %s0 = inlined_call_operand.hbm [shape: f32[16,32], index: 0, kind: input, shape index: {}]
  %s1 = inlined_call_operand.hbm [shape: f32[16,8], index: 1, kind: input, shape index: {}]
  %s2 = inlined_call_operand.hbm [shape: f32[488,128], index: 2, kind: input, shape index: {}]
  %s3 = inlined_call_operand.hbm [shape: f32[16,32], index: 3, kind: output, shape index: {}]
  %s4 = sld [smem:[#allocation0]]
  $region34: #{encoder_layer.1} parent=0
    _
  %s6 = ssub.s32 1, %s4
  %s7 = scalar_select 0, %s6, %s4
  $region1: #{encoder_layer.1} parent=0
    #allocation2 [shape = 'u8[8192]{0}', space=vmem, size = 0x2000, scoped, tag = 'input window, operand 0, single buffered']
    #allocation3 [shape = 's32[1]{0}', space=sflag, size = 0x4, scoped, tag = 'scoped memory for encoder_layer.1']
    #allocation4 [shape = 's32[1]{0}', space=sflag, size = 0x4, scoped, tag = 'scoped memory for encoder_layer.1']
    #allocation5 [shape = 'u8[8192]{0}', space=vmem, size = 0x2000, scoped, tag = 'input window, operand 1, single buffered']
    #allocation6 [shape = 's32[1]{0}', space=sflag, size = 0x4, scoped, tag = 'scoped memory for encoder_layer.1']
    #allocation7 [shape = 'u8[249856]{0}', space=vmem, size = 0x3d000, scoped, tag = 'input window, operand 2, single buffered']
    #allocation8 [shape = 'u8[8192]{0}', space=vmem, size = 0x2000, scoped, tag = 'output window, operand 0, single buffered']
    %8 = vsyncpa [#allocation3], 0
    %9 = vsyncpa [#allocation6], 0
    %10 = vsyncpa [#allocation4], 0
    // Predicated region
    $region2: #{encoder_layer.1} parent=1 // pred_check
      _
    $region3: #{encoder_layer.1} parent=1 // pred_check_branch
      %12 = sbr.rel (0) target = $region5
    $region4: #{encoder_layer.1} parent=1 // pred_region
      %s14 = ssub.s32 256, 256
      %15 = vsyncadd [#allocation3], %s14
      %s16 = sshll.u32 [#allocation2], 4
      %s17 = int_to_ptr.vmem [resolvable:$true] %s16
      %22 = dma.hbm_to_vmem [thread:$0]  %s0, 256, %s17, [#allocation3], 128, 128, 8
    $region5: #{encoder_layer.1} parent=1 // pred_fallthru
      _
    // Predicated region
    $region6: #{encoder_layer.1} parent=1 // pred_check
      _
    $region7: #{encoder_layer.1} parent=1 // pred_check_branch
      %24 = sbr.rel (0) target = $region9
    $region8: #{encoder_layer.1} parent=1 // pred_region
      %s26 = ssub.s32 256, 256
      %27 = vsyncadd [#allocation6], %s26
      %s28 = sshll.u32 [#allocation5], 4
      %s29 = int_to_ptr.vmem [resolvable:$true] %s28
      %34 = dma.hbm_to_vmem [thread:$0]  %s1, 256, %s29, [#allocation6], 128, 128, 8
    $region9: #{encoder_layer.1} parent=1 // pred_fallthru
      _
    // Predicated region
    $region10: #{encoder_layer.1} parent=1 // pred_check
      _
    $region11: #{encoder_layer.1} parent=1 // pred_check_branch
      %36 = sbr.rel (0) target = $region13
    $region12: #{encoder_layer.1} parent=1 // pred_region
      %s38 = ssub.s32 7808, 7808
      %39 = vsyncadd [#allocation6], %s38
      %s40 = sshll.u32 [#allocation7], 4
      %s41 = int_to_ptr.vmem [resolvable:$true] %s40
      %46 = dma.hbm_to_vmem [thread:$0]  %s2, 7808, %s41, [#allocation6], 128, 128, 8
    $region13: #{encoder_layer.1} parent=1 // pred_fallthru
      _
    // Predicated region
    $region14: #{encoder_layer.1} parent=1 // pred_check
      _
    $region15: #{encoder_layer.1} parent=1 // pred_check_branch
      %48 = sbr.rel (0) target = $region17
    $region16: #{encoder_layer.1} parent=1 // pred_region
      %49 = dma.done [#allocation3], 256
    $region17: #{encoder_layer.1} parent=1 // pred_fallthru
      _
    // Predicated region
    $region18: #{encoder_layer.1} parent=1 // pred_check
      _
    $region19: #{encoder_layer.1} parent=1 // pred_check_branch
      %51 = sbr.rel (0) target = $region21
    $region20: #{encoder_layer.1} parent=1 // pred_region
      %52 = dma.done [#allocation6], 256
    $region21: #{encoder_layer.1} parent=1 // pred_fallthru
      _
    // Predicated region
    $region22: #{encoder_layer.1} parent=1 // pred_check
      _
    $region23: #{encoder_layer.1} parent=1 // pred_check_branch
      %54 = sbr.rel (0) target = $region25
    $region24: #{encoder_layer.1} parent=1 // pred_region
      %55 = dma.done [#allocation6], 7808
    $region25: #{encoder_layer.1} parent=1 // pred_fallthru
      _
    %v57 = vld [vmem:[#allocation2] sm:$0xff]
    %v58 = vld [vmem:[#allocation2 + $0x8] sm:$0xff]
    %v59 = vld [vmem:[#allocation5] sm:$0xff]
    %v60 = vld [vmem:[#allocation5 + $0x8] sm:$0xff]
    %v61 = vld [vmem:[#allocation7] sm:$0x1]
    %v62 = vld [vmem:[#allocation7 + $0x1] sm:$0x1]
    %v63 = vld [vmem:[#allocation7 + $0x2] sm:$0x1]
    %v64 = vld [vmem:[#allocation7 + $0x3] sm:$0x1]
    %v65 = vld [vmem:[#allocation7 + $0x4] sm:$0x1]
    %v66 = vld [vmem:[#allocation7 + $0x5] sm:$0x1]
    %v67 = vld [vmem:[#allocation7 + $0x6] sm:$0x1]
    %v68 = vld [vmem:[#allocation7 + $0x8] sm:$0xff]
    %v69 = vld [vmem:[#allocation7 + $0x10] sm:$0xff]
    %v70 = vld [vmem:[#allocation7 + $0x18] sm:$0xff]
    %v71 = vld [vmem:[#allocation7 + $0x20] sm:$0xff]
    %v72 = vld [vmem:[#allocation7 + $0x28] sm:$0xff]
    %v73 = vld [vmem:[#allocation7 + $0x30] sm:$0xff]
    %v74 = vld [vmem:[#allocation7 + $0x38] sm:$0xff]
    %v75 = vld [vmem:[#allocation7 + $0x40] sm:$0xff]
    %v76 = vld [vmem:[#allocation7 + $0x48] sm:$0xff]
    %v77 = vld [vmem:[#allocation7 + $0x50] sm:$0xff]
    %v78 = vld [vmem:[#allocation7 + $0x58] sm:$0xff]
    %v79 = vld [vmem:[#allocation7 + $0x60] sm:$0xff]
    %v80 = vld [vmem:[#allocation7 + $0x68] sm:$0xff]
    %v81 = vld [vmem:[#allocation7 + $0x70] sm:$0xff]
    %v82 = vld [vmem:[#allocation7 + $0x78] sm:$0xff]
    %v83 = vld [vmem:[#allocation7 + $0x80] sm:$0xff]
    %v84 = vld [vmem:[#allocation7 + $0x88] sm:$0xff]
    %v85 = vld [vmem:[#allocation7 + $0x90] sm:$0xff]
    %v86 = vld [vmem:[#allocation7 + $0x98] sm:$0xff]
    %v87 = vld [vmem:[#allocation7 + $0xa0] sm:$0xff]
    %v88 = vld [vmem:[#allocation7 + $0xa8] sm:$0xff]
    %v89 = vld [vmem:[#allocation7 + $0xb0] sm:$0xff]
    %v90 = vld [vmem:[#allocation7 + $0xb8] sm:$0xff]
    %v91 = vld [vmem:[#allocation7 + $0xc0] sm:$0xff]
    %v92 = vld [vmem:[#allocation7 + $0xc8] sm:$0xff]
    %v93 = vld [vmem:[#allocation7 + $0xd0] sm:$0xff]
    %v94 = vld [vmem:[#allocation7 + $0xd8] sm:$0xff]
    %v95 = vld [vmem:[#allocation7 + $0xe0] sm:$0xff]
    %v96 = vld [vmem:[#allocation7 + $0xe8] sm:$0xff]
    %v97 = vld [vmem:[#allocation7 + $0xf0] sm:$0xff]
    %v98 = vld [vmem:[#allocation7 + $0xf8] sm:$0xff]
    %v99 = vld [vmem:[#allocation7 + $0x100] sm:$0xff]
    %v100 = vld [vmem:[#allocation7 + $0x108] sm:$0xff]
    %v101 = vld [vmem:[#allocation7 + $0x110] sm:$0xff]
    %v102 = vld [vmem:[#allocation7 + $0x118] sm:$0xff]
    %v103 = vld [vmem:[#allocation7 + $0x120] sm:$0xff]
    %v104 = vld [vmem:[#allocation7 + $0x128] sm:$0xff]
    %v105 = vld [vmem:[#allocation7 + $0x130] sm:$0xff]
    %v106 = vld [vmem:[#allocation7 + $0x138] sm:$0xff]
    %v107 = vld [vmem:[#allocation7 + $0x140] sm:$0xff]
    %v108 = vld [vmem:[#allocation7 + $0x148] sm:$0xff]
    %v109 = vld [vmem:[#allocation7 + $0x150] sm:$0xff]
    %v110 = vld [vmem:[#allocation7 + $0x158] sm:$0xff]
    %v111 = vld [vmem:[#allocation7 + $0x160] sm:$0xff]
    %v112 = vld [vmem:[#allocation7 + $0x168] sm:$0xff]
    %v113 = vld [vmem:[#allocation7 + $0x170] sm:$0xff]
    %v114 = vld [vmem:[#allocation7 + $0x178] sm:$0xff]
    %v115 = vld [vmem:[#allocation7 + $0x180] sm:$0xff]
    %v116 = vld [vmem:[#allocation7 + $0x188] sm:$0xff]
    %v117 = vld [vmem:[#allocation7 + $0x190] sm:$0xff]
    %v118 = vld [vmem:[#allocation7 + $0x198] sm:$0xff]
    %v119 = vld [vmem:[#allocation7 + $0x1a0] sm:$0xff]
    %v120 = vld [vmem:[#allocation7 + $0x1a8] sm:$0xff]
    %v121 = vld [vmem:[#allocation7 + $0x1b0] sm:$0xff]
    %v122 = vld [vmem:[#allocation7 + $0x1b8] sm:$0xff]
    %v123 = vld [vmem:[#allocation7 + $0x1c0] sm:$0xff]
    %v124 = vld [vmem:[#allocation7 + $0x1c8] sm:$0xff]
    %v125 = vld [vmem:[#allocation7 + $0x1d0] sm:$0xff]
    %v126 = vld [vmem:[#allocation7 + $0x1d8] sm:$0xff]
    %v127 = vld [vmem:[#allocation7 + $0x1e0] sm:$0xff]
    %v128 = vpack.c.bf16 %v57, %v57
    %v129 = vpack.c.bf16 %v58, %v58
    %v130 = vpack.c.bf16 %v69, %v68
    %v131 = vpack.c.bf16 %v71, %v70
    %v132 = vpack.c.bf16 %v73, %v72
    %v133 = vpack.c.bf16 %v75, %v74
    %v134 = vpack.c.bf16 %v77, %v76
    %v135 = vpack.c.bf16 %v79, %v78
    %v136 = vpack.c.bf16 %v81, %v80
    %v137 = vpack.c.bf16 %v83, %v82
    %v138 = vpack.c.bf16 %v85, %v84
    %v139 = vpack.c.bf16 %v87, %v86
    %v140 = vpack.c.bf16 %v89, %v88
    %v141 = vpack.c.bf16 %v91, %v90
    %v142 = vpack.c.bf16 %v93, %v92
    %v143 = vpack.c.bf16 %v95, %v94
    %v144 = vpack.c.bf16 %v97, %v96
    %v145 = vpack.c.bf16 %v99, %v98
    %vm146 = vcmask 261120
    %v148 = vsel %vm146, %v128, 0
    %150 = vmatprep.subr.bf16.mxu0 0
    %151 = vmatpush1.bf16.msra.mxu0 %v130
    %152 = vmatprep.subr.bf16.mxu0 0
    %153 = vmatpush1.bf16.msra.mxu0 %v131
    %154 = vmatprep.subr.bf16.mxu0 0
    %155 = vmatpush1.bf16.msra.mxu0 0
    %156 = vmatprep.subr.bf16.mxu0 0
    %157 = vmatpush1.bf16.msra.mxu0 0
    %158 = vmatprep.subr.bf16.mxu0 0
    %159 = vmatpush1.bf16.msra.mxu0 0
    %160 = vmatprep.subr.bf16.mxu0 0
    %161 = vmatpush1.bf16.msra.mxu0 0
    %162 = vmatprep.subr.bf16.mxu0 0
    %163 = vmatpush1.bf16.msra.mxu0 0
    %164 = vmatprep.subr.bf16.mxu0 0
    %165 = vmatpush1.bf16.msra.mxu0 0
    %166 = vmatprep.subr.bf16.mxu0 0
    %167 = vmatpush1.bf16.msra.mxu0 0
    %168 = vmatprep.subr.bf16.mxu0 0
    %169 = vmatpush1.bf16.msra.mxu0 0
    %170 = vmatprep.subr.bf16.mxu0 0
    %171 = vmatpush1.bf16.msra.mxu0 0
    %172 = vmatprep.subr.bf16.mxu0 0
    %173 = vmatpush1.bf16.msra.mxu0 0
    %174 = vmatprep.subr.bf16.mxu0 0
    %175 = vmatpush1.bf16.msra.mxu0 0
    %176 = vmatprep.subr.bf16.mxu0 0
    %177 = vmatpush1.bf16.msra.mxu0 0
    %178 = vmatprep.subr.bf16.mxu0 0
    %179 = vmatpush1.bf16.msra.mxu0 0
    %180 = vmatprep.subr.bf16.mxu0 0
    %181 = vmatpush1.bf16.msra.mxu0 0
    %182 = vmatprep.mubr.bf16.mxu0 0
    %183 = vmatmul.mubr.bf16.gmra.mrb[0].mxu0 %v148
    %v184 = vpop.f32.mrb[0].mxu0
    %v185 = vadd.f32 %v100, %v184
    %v186 = vpop.f32.mrb[0].mxu0
    %v187 = vpop.f32.mrb[0].mxu0
    %v188 = vpop.f32.mrb[0].mxu0
    %189 = vdwg.mxu0
    %190 = vmatprep.subr.bf16.mxu0 0
    %191 = vmatpush1.bf16.msra.mxu0 %v132
    %192 = vmatprep.subr.bf16.mxu0 0
    %193 = vmatpush1.bf16.msra.mxu0 %v133
    %194 = vmatprep.subr.bf16.mxu0 0
    %195 = vmatpush1.bf16.msra.mxu0 0
    %196 = vmatprep.subr.bf16.mxu0 0
    %197 = vmatpush1.bf16.msra.mxu0 0
    %198 = vmatprep.subr.bf16.mxu0 0
    %199 = vmatpush1.bf16.msra.mxu0 0
    %200 = vmatprep.subr.bf16.mxu0 0
    %201 = vmatpush1.bf16.msra.mxu0 0
    %202 = vmatprep.subr.bf16.mxu0 0
    %203 = vmatpush1.bf16.msra.mxu0 0
    %204 = vmatprep.subr.bf16.mxu0 0
    %205 = vmatpush1.bf16.msra.mxu0 0
    %206 = vmatprep.subr.bf16.mxu0 0
    %207 = vmatpush1.bf16.msra.mxu0 0
    %208 = vmatprep.subr.bf16.mxu0 0
    %209 = vmatpush1.bf16.msra.mxu0 0
    %210 = vmatprep.subr.bf16.mxu0 0
    %211 = vmatpush1.bf16.msra.mxu0 0
    %212 = vmatprep.subr.bf16.mxu0 0
    %213 = vmatpush1.bf16.msra.mxu0 0
    %214 = vmatprep.subr.bf16.mxu0 0
    %215 = vmatpush1.bf16.msra.mxu0 0
    %216 = vmatprep.subr.bf16.mxu0 0
    %217 = vmatpush1.bf16.msra.mxu0 0
    %218 = vmatprep.subr.bf16.mxu0 0
    %219 = vmatpush1.bf16.msra.mxu0 0
    %220 = vmatprep.subr.bf16.mxu0 0
    %221 = vmatpush1.bf16.msra.mxu0 0
    %222 = vmatprep.mubr.bf16.mxu0 0
    %223 = vmatmul.mubr.bf16.gmra.mrb[0].mxu0 %v148
    %v224 = vpop.f32.mrb[0].mxu0
    %v225 = vadd.f32 %v101, %v224
    %v226 = vpop.f32.mrb[0].mxu0
    %v227 = vpop.f32.mrb[0].mxu0
    %v228 = vpop.f32.mrb[0].mxu0
    %229 = vdwg.mxu0
    %230 = vmatprep.subr.bf16.mxu0 0
    %231 = vmatpush1.bf16.msra.mxu0 %v134
    %232 = vmatprep.subr.bf16.mxu0 0
    %233 = vmatpush1.bf16.msra.mxu0 %v135
    %234 = vmatprep.subr.bf16.mxu0 0
    %235 = vmatpush1.bf16.msra.mxu0 0
    %236 = vmatprep.subr.bf16.mxu0 0
    %237 = vmatpush1.bf16.msra.mxu0 0
    %238 = vmatprep.subr.bf16.mxu0 0
    %239 = vmatpush1.bf16.msra.mxu0 0
    %240 = vmatprep.subr.bf16.mxu0 0
    %241 = vmatpush1.bf16.msra.mxu0 0
    %242 = vmatprep.subr.bf16.mxu0 0
    %243 = vmatpush1.bf16.msra.mxu0 0
    %244 = vmatprep.subr.bf16.mxu0 0
    %245 = vmatpush1.bf16.msra.mxu0 0
    %246 = vmatprep.subr.bf16.mxu0 0
    %247 = vmatpush1.bf16.msra.mxu0 0
    %248 = vmatprep.subr.bf16.mxu0 0
    %249 = vmatpush1.bf16.msra.mxu0 0
    %250 = vmatprep.subr.bf16.mxu0 0
    %251 = vmatpush1.bf16.msra.mxu0 0
    %252 = vmatprep.subr.bf16.mxu0 0
    %253 = vmatpush1.bf16.msra.mxu0 0
    %254 = vmatprep.subr.bf16.mxu0 0
    %255 = vmatpush1.bf16.msra.mxu0 0
    %256 = vmatprep.subr.bf16.mxu0 0
    %257 = vmatpush1.bf16.msra.mxu0 0
    %258 = vmatprep.subr.bf16.mxu0 0
    %259 = vmatpush1.bf16.msra.mxu0 0
    %260 = vmatprep.subr.bf16.mxu0 0
    %261 = vmatpush1.bf16.msra.mxu0 0
    %262 = vmatprep.mubr.bf16.mxu0 0
    %263 = vmatmul.mubr.bf16.gmra.mrb[0].mxu0 %v148
    %v264 = vpop.f32.mrb[0].mxu0
    %v265 = vadd.f32 %v102, %v264
    %v266 = vpop.f32.mrb[0].mxu0
    %v267 = vpop.f32.mrb[0].mxu0
    %v268 = vpop.f32.mrb[0].mxu0
    %269 = vdwg.mxu0
    %270 = vmatprep.subr.bf16.mxu0 0
    %271 = vmatpush1.bf16.msra.mxu0 %v136
    %272 = vmatprep.subr.bf16.mxu0 0
    %273 = vmatpush1.bf16.msra.mxu0 %v137
    %274 = vmatprep.subr.bf16.mxu0 0
    %275 = vmatpush1.bf16.msra.mxu0 0
    %276 = vmatprep.subr.bf16.mxu0 0
    %277 = vmatpush1.bf16.msra.mxu0 0
    %278 = vmatprep.subr.bf16.mxu0 0
    %279 = vmatpush1.bf16.msra.mxu0 0
    %280 = vmatprep.subr.bf16.mxu0 0
    %281 = vmatpush1.bf16.msra.mxu0 0
    %282 = vmatprep.subr.bf16.mxu0 0
    %283 = vmatpush1.bf16.msra.mxu0 0
    %284 = vmatprep.subr.bf16.mxu0 0
    %285 = vmatpush1.bf16.msra.mxu0 0
    %286 = vmatprep.subr.bf16.mxu0 0
    %287 = vmatpush1.bf16.msra.mxu0 0
    %288 = vmatprep.subr.bf16.mxu0 0
    %289 = vmatpush1.bf16.msra.mxu0 0
    %290 = vmatprep.subr.bf16.mxu0 0
    %291 = vmatpush1.bf16.msra.mxu0 0
    %292 = vmatprep.subr.bf16.mxu0 0
    %293 = vmatpush1.bf16.msra.mxu0 0
    %294 = vmatprep.subr.bf16.mxu0 0
    %295 = vmatpush1.bf16.msra.mxu0 0
    %296 = vmatprep.subr.bf16.mxu0 0
    %297 = vmatpush1.bf16.msra.mxu0 0
    %298 = vmatprep.subr.bf16.mxu0 0
    %299 = vmatpush1.bf16.msra.mxu0 0
    %300 = vmatprep.subr.bf16.mxu0 0
    %301 = vmatpush1.bf16.msra.mxu0 0
    %302 = vmatprep.mubr.bf16.mxu0 0
    %303 = vmatmul.mubr.bf16.gmra.mrb[0].mxu0 %v148
    %v304 = vpop.f32.mrb[0].mxu0
    %v305 = vadd.f32 %v103, %v304
    %v306 = vpop.f32.mrb[0].mxu0
    %v307 = vpop.f32.mrb[0].mxu0
    %v308 = vpop.f32.mrb[0].mxu0
    %309 = vdwg.mxu0
    %v311 = vsel %vm146, %v129, 0
    %313 = vmatprep.subr.bf16.mxu0 0
    %314 = vmatpush1.bf16.msra.mxu0 %v138
    %315 = vmatprep.subr.bf16.mxu0 0
    %316 = vmatpush1.bf16.msra.mxu0 %v139
    %317 = vmatprep.subr.bf16.mxu0 0
    %318 = vmatpush1.bf16.msra.mxu0 0
    %319 = vmatprep.subr.bf16.mxu0 0
    %320 = vmatpush1.bf16.msra.mxu0 0
    %321 = vmatprep.subr.bf16.mxu0 0
    %322 = vmatpush1.bf16.msra.mxu0 0
    %323 = vmatprep.subr.bf16.mxu0 0
    %324 = vmatpush1.bf16.msra.mxu0 0
    %325 = vmatprep.subr.bf16.mxu0 0
    %326 = vmatpush1.bf16.msra.mxu0 0
    %327 = vmatprep.subr.bf16.mxu0 0
    %328 = vmatpush1.bf16.msra.mxu0 0
    %329 = vmatprep.subr.bf16.mxu0 0
    %330 = vmatpush1.bf16.msra.mxu0 0
    %331 = vmatprep.subr.bf16.mxu0 0
    %332 = vmatpush1.bf16.msra.mxu0 0
    %333 = vmatprep.subr.bf16.mxu0 0
    %334 = vmatpush1.bf16.msra.mxu0 0
    %335 = vmatprep.subr.bf16.mxu0 0
    %336 = vmatpush1.bf16.msra.mxu0 0
    %337 = vmatprep.subr.bf16.mxu0 0
    %338 = vmatpush1.bf16.msra.mxu0 0
    %339 = vmatprep.subr.bf16.mxu0 0
    %340 = vmatpush1.bf16.msra.mxu0 0
    %341 = vmatprep.subr.bf16.mxu0 0
    %342 = vmatpush1.bf16.msra.mxu0 0
    %343 = vmatprep.subr.bf16.mxu0 0
    %344 = vmatpush1.bf16.msra.mxu0 0
    %345 = vmatprep.mubr.bf16.mxu0 0
    %346 = vmatmul.mubr.bf16.gmra.mrb[0].mxu0 %v311
    %v347 = vpop.f32.mrb[0].mxu0
    %v348 = vadd.f32 %v104, %v347
    %v349 = vpop.f32.mrb[0].mxu0
    %v350 = vpop.f32.mrb[0].mxu0
    %v351 = vpop.f32.mrb[0].mxu0
    %352 = vdwg.mxu0
    %353 = vmatprep.subr.bf16.mxu0 0
    %354 = vmatpush1.bf16.msra.mxu0 %v140
    %355 = vmatprep.subr.bf16.mxu0 0
    %356 = vmatpush1.bf16.msra.mxu0 %v141
    %357 = vmatprep.subr.bf16.mxu0 0
    %358 = vmatpush1.bf16.msra.mxu0 0
    %359 = vmatprep.subr.bf16.mxu0 0
    %360 = vmatpush1.bf16.msra.mxu0 0
    %361 = vmatprep.subr.bf16.mxu0 0
    %362 = vmatpush1.bf16.msra.mxu0 0
    %363 = vmatprep.subr.bf16.mxu0 0
    %364 = vmatpush1.bf16.msra.mxu0 0
    %365 = vmatprep.subr.bf16.mxu0 0
    %366 = vmatpush1.bf16.msra.mxu0 0
    %367 = vmatprep.subr.bf16.mxu0 0
    %368 = vmatpush1.bf16.msra.mxu0 0
    %369 = vmatprep.subr.bf16.mxu0 0
    %370 = vmatpush1.bf16.msra.mxu0 0
    %371 = vmatprep.subr.bf16.mxu0 0
    %372 = vmatpush1.bf16.msra.mxu0 0
    %373 = vmatprep.subr.bf16.mxu0 0
    %374 = vmatpush1.bf16.msra.mxu0 0
    %375 = vmatprep.subr.bf16.mxu0 0
    %376 = vmatpush1.bf16.msra.mxu0 0
    %377 = vmatprep.subr.bf16.mxu0 0
    %378 = vmatpush1.bf16.msra.mxu0 0
    %379 = vmatprep.subr.bf16.mxu0 0
    %380 = vmatpush1.bf16.msra.mxu0 0
    %381 = vmatprep.subr.bf16.mxu0 0
    %382 = vmatpush1.bf16.msra.mxu0 0
    %383 = vmatprep.subr.bf16.mxu0 0
    %384 = vmatpush1.bf16.msra.mxu0 0
    %385 = vmatprep.mubr.bf16.mxu0 0
    %386 = vmatmul.mubr.bf16.gmra.mrb[0].mxu0 %v311
    %v387 = vpop.f32.mrb[0].mxu0
    %v388 = vadd.f32 %v105, %v387
    %v389 = vpop.f32.mrb[0].mxu0
    %v390 = vpop.f32.mrb[0].mxu0
    %v391 = vpop.f32.mrb[0].mxu0
    %392 = vdwg.mxu0
    %393 = vmatprep.subr.bf16.mxu0 0
    %394 = vmatpush1.bf16.msra.mxu0 %v142
    %395 = vmatprep.subr.bf16.mxu0 0
    %396 = vmatpush1.bf16.msra.mxu0 %v143
    %397 = vmatprep.subr.bf16.mxu0 0
    %398 = vmatpush1.bf16.msra.mxu0 0
    %399 = vmatprep.subr.bf16.mxu0 0
    %400 = vmatpush1.bf16.msra.mxu0 0
    %401 = vmatprep.subr.bf16.mxu0 0
    %402 = vmatpush1.bf16.msra.mxu0 0
    %403 = vmatprep.subr.bf16.mxu0 0
    %404 = vmatpush1.bf16.msra.mxu0 0
    %405 = vmatprep.subr.bf16.mxu0 0
    %406 = vmatpush1.bf16.msra.mxu0 0
    %407 = vmatprep.subr.bf16.mxu0 0
    %408 = vmatpush1.bf16.msra.mxu0 0
    %409 = vmatprep.subr.bf16.mxu0 0
    %410 = vmatpush1.bf16.msra.mxu0 0
    %411 = vmatprep.subr.bf16.mxu0 0
    %412 = vmatpush1.bf16.msra.mxu0 0
    %413 = vmatprep.subr.bf16.mxu0 0
    %414 = vmatpush1.bf16.msra.mxu0 0
    %415 = vmatprep.subr.bf16.mxu0 0
    %416 = vmatpush1.bf16.msra.mxu0 0
    %417 = vmatprep.subr.bf16.mxu0 0
    %418 = vmatpush1.bf16.msra.mxu0 0
    %419 = vmatprep.subr.bf16.mxu0 0
    %420 = vmatpush1.bf16.msra.mxu0 0
    %421 = vmatprep.subr.bf16.mxu0 0
    %422 = vmatpush1.bf16.msra.mxu0 0
    %423 = vmatprep.subr.bf16.mxu0 0
    %424 = vmatpush1.bf16.msra.mxu0 0
    %425 = vmatprep.mubr.bf16.mxu0 0
    %426 = vmatmul.mubr.bf16.gmra.mrb[0].mxu0 %v311
    %v427 = vpop.f32.mrb[0].mxu0
    %v428 = vadd.f32 %v106, %v427
    %v429 = vpop.f32.mrb[0].mxu0
    %v430 = vpop.f32.mrb[0].mxu0
    %v431 = vpop.f32.mrb[0].mxu0
    %432 = vdwg.mxu0
    %433 = vmatprep.subr.bf16.mxu0 0
    %434 = vmatpush1.bf16.msra.mxu0 %v144
    %435 = vmatprep.subr.bf16.mxu0 0
    %436 = vmatpush1.bf16.msra.mxu0 %v145
    %437 = vmatprep.subr.bf16.mxu0 0
    %438 = vmatpush1.bf16.msra.mxu0 0
    %439 = vmatprep.subr.bf16.mxu0 0
    %440 = vmatpush1.bf16.msra.mxu0 0
    %441 = vmatprep.subr.bf16.mxu0 0
    %442 = vmatpush1.bf16.msra.mxu0 0
    %443 = vmatprep.subr.bf16.mxu0 0
    %444 = vmatpush1.bf16.msra.mxu0 0
    %445 = vmatprep.subr.bf16.mxu0 0
    %446 = vmatpush1.bf16.msra.mxu0 0
    %447 = vmatprep.subr.bf16.mxu0 0
    %448 = vmatpush1.bf16.msra.mxu0 0
    %449 = vmatprep.subr.bf16.mxu0 0
    %450 = vmatpush1.bf16.msra.mxu0 0
    %451 = vmatprep.subr.bf16.mxu0 0
    %452 = vmatpush1.bf16.msra.mxu0 0
    %453 = vmatprep.subr.bf16.mxu0 0
    %454 = vmatpush1.bf16.msra.mxu0 0
    %455 = vmatprep.subr.bf16.mxu0 0
    %456 = vmatpush1.bf16.msra.mxu0 0
    %457 = vmatprep.subr.bf16.mxu0 0
    %458 = vmatpush1.bf16.msra.mxu0 0
    %459 = vmatprep.subr.bf16.mxu0 0
    %460 = vmatpush1.bf16.msra.mxu0 0
    %461 = vmatprep.subr.bf16.mxu0 0
    %462 = vmatpush1.bf16.msra.mxu0 0
    %463 = vmatprep.subr.bf16.mxu0 0
    %464 = vmatpush1.bf16.msra.mxu0 0
    %465 = vmatprep.mubr.bf16.mxu0 0
    %466 = vmatmul.mubr.bf16.gmra.mrb[0].mxu0 %v311
    %v467 = vpop.f32.mrb[0].mxu0
    %v468 = vadd.f32 %v107, %v467
    %v469 = vpop.f32.mrb[0].mxu0
    %v470 = vpop.f32.mrb[0].mxu0
    %v471 = vpop.f32.mrb[0].mxu0
    %472 = vdwg.mxu0
    %vm473 = vcmp.ne.f32.partialorder %v59, 0.0
    %vm474 = vcmp.ne.f32.partialorder %v60, 0.0
    %v475 = vsel %vm473, 0.0, -1e+09
    %v476 = vsel %vm474, 0.0, -1e+09
    %v477 = vpack.c.bf16 %v185, %v185
    %v478 = vpack.c.bf16 %v225, %v225
    %v479 = vpack.c.bf16 %v265, %v265
    %v480 = vpack.c.bf16 %v305, %v305
    %v481 = vpack.c.bf16 %v348, %v348
    %v482 = vpack.c.bf16 %v388, %v388
    %v483 = vpack.c.bf16 %v428, %v428
    %v484 = vpack.c.bf16 %v468, %v468
    %486 = vrot.lane.b32.xlu0 %v477, 120
    %v487 = vpop.permute.xlu0 %486
    %vm488 = vcmask 64512
    %v490 = vsel %vm488, %v477, 0
    %v493 = vsel %vm488, %v487, 0
    %495 = vmatprep.subr.bf16.mxu0 0
    %496 = vmatpush1.bf16.xpose.msra.mxu0 %v493
    %497 = vmatprep.subr.bf16.mxu0 0
    %498 = vmatpush1.bf16.xpose.msra.mxu0 0
    %499 = vmatprep.subr.bf16.mxu0 0
    %500 = vmatpush1.bf16.xpose.msra.mxu0 0
    %501 = vmatprep.subr.bf16.mxu0 0
    %502 = vmatpush1.bf16.xpose.msra.mxu0 0
    %503 = vmatprep.subr.bf16.mxu0 0
    %504 = vmatpush1.bf16.xpose.msra.mxu0 0
    %505 = vmatprep.subr.bf16.mxu0 0
    %506 = vmatpush1.bf16.xpose.msra.mxu0 0
    %507 = vmatprep.subr.bf16.mxu0 0
    %508 = vmatpush1.bf16.xpose.msra.mxu0 0
    %509 = vmatprep.subr.bf16.mxu0 0
    %510 = vmatpush1.bf16.xpose.msra.mxu0 0
    %511 = vmatprep.subr.bf16.mxu0 0
    %512 = vmatpush1.bf16.xpose.msra.mxu0 0
    %513 = vmatprep.subr.bf16.mxu0 0
    %514 = vmatpush1.bf16.xpose.msra.mxu0 0
    %515 = vmatprep.subr.bf16.mxu0 0
    %516 = vmatpush1.bf16.xpose.msra.mxu0 0
    %517 = vmatprep.subr.bf16.mxu0 0
    %518 = vmatpush1.bf16.xpose.msra.mxu0 0
    %519 = vmatprep.subr.bf16.mxu0 0
    %520 = vmatpush1.bf16.xpose.msra.mxu0 0
    %521 = vmatprep.subr.bf16.mxu0 0
    %522 = vmatpush1.bf16.xpose.msra.mxu0 0
    %523 = vmatprep.subr.bf16.mxu0 0
    %524 = vmatpush1.bf16.xpose.msra.mxu0 0
    %525 = vmatprep.subr.bf16.mxu0 0
    %526 = vmatpush1.bf16.xpose.msra.mxu0 0
    %527 = vmatprep.mubr.bf16.mxu0 0
    %528 = vmatmul.mubr.bf16.gmra.mrb[0].mxu0 %v490
    %v529 = vpop.f32.mrb[0].mxu0
    %v530 = vadd.f32 %v475, %v529
    %v531 = vpop.f32.mrb[0].mxu0
    %v532 = vpop.f32.mrb[0].mxu0
    %v533 = vpop.f32.mrb[0].mxu0
    %534 = vdwg.mxu0
    %536 = vrot.lane.b32.xlu0 %v478, 120
    %v537 = vpop.permute.xlu0 %536
    %v539 = vsel %vm488, %v478, 0
    %v542 = vsel %vm488, %v537, 0
    %544 = vmatprep.subr.bf16.mxu0 0
    %545 = vmatpush1.bf16.xpose.msra.mxu0 %v542
    %546 = vmatprep.subr.bf16.mxu0 0
    %547 = vmatpush1.bf16.xpose.msra.mxu0 0
    %548 = vmatprep.subr.bf16.mxu0 0
    %549 = vmatpush1.bf16.xpose.msra.mxu0 0
    %550 = vmatprep.subr.bf16.mxu0 0
    %551 = vmatpush1.bf16.xpose.msra.mxu0 0
    %552 = vmatprep.subr.bf16.mxu0 0
    %553 = vmatpush1.bf16.xpose.msra.mxu0 0
    %554 = vmatprep.subr.bf16.mxu0 0
    %555 = vmatpush1.bf16.xpose.msra.mxu0 0
    %556 = vmatprep.subr.bf16.mxu0 0
    %557 = vmatpush1.bf16.xpose.msra.mxu0 0
    %558 = vmatprep.subr.bf16.mxu0 0
    %559 = vmatpush1.bf16.xpose.msra.mxu0 0
    %560 = vmatprep.subr.bf16.mxu0 0
    %561 = vmatpush1.bf16.xpose.msra.mxu0 0
    %562 = vmatprep.subr.bf16.mxu0 0
    %563 = vmatpush1.bf16.xpose.msra.mxu0 0
    %564 = vmatprep.subr.bf16.mxu0 0
    %565 = vmatpush1.bf16.xpose.msra.mxu0 0
    %566 = vmatprep.subr.bf16.mxu0 0
    %567 = vmatpush1.bf16.xpose.msra.mxu0 0
    %568 = vmatprep.subr.bf16.mxu0 0
    %569 = vmatpush1.bf16.xpose.msra.mxu0 0
    %570 = vmatprep.subr.bf16.mxu0 0
    %571 = vmatpush1.bf16.xpose.msra.mxu0 0
    %572 = vmatprep.subr.bf16.mxu0 0
    %573 = vmatpush1.bf16.xpose.msra.mxu0 0
    %574 = vmatprep.subr.bf16.mxu0 0
    %575 = vmatpush1.bf16.xpose.msra.mxu0 0
    %576 = vmatprep.mubr.bf16.mxu0 0
    %577 = vmatmul.mubr.bf16.gmra.mrb[0].mxu0 %v539
    %v578 = vpop.f32.mrb[0].mxu0
    %v579 = vadd.f32 %v475, %v578
    %v580 = vpop.f32.mrb[0].mxu0
    %v581 = vpop.f32.mrb[0].mxu0
    %v582 = vpop.f32.mrb[0].mxu0
    %583 = vdwg.mxu0
    %585 = vrot.lane.b32.xlu0 %v479, 120
    %v586 = vpop.permute.xlu0 %585
    %v588 = vsel %vm488, %v479, 0
    %v591 = vsel %vm488, %v586, 0
    %593 = vmatprep.subr.bf16.mxu0 0
    %594 = vmatpush1.bf16.xpose.msra.mxu0 %v591
    %595 = vmatprep.subr.bf16.mxu0 0
    %596 = vmatpush1.bf16.xpose.msra.mxu0 0
    %597 = vmatprep.subr.bf16.mxu0 0
    %598 = vmatpush1.bf16.xpose.msra.mxu0 0
    %599 = vmatprep.subr.bf16.mxu0 0
    %600 = vmatpush1.bf16.xpose.msra.mxu0 0
    %601 = vmatprep.subr.bf16.mxu0 0
    %602 = vmatpush1.bf16.xpose.msra.mxu0 0
    %603 = vmatprep.subr.bf16.mxu0 0
    %604 = vmatpush1.bf16.xpose.msra.mxu0 0
    %605 = vmatprep.subr.bf16.mxu0 0
    %606 = vmatpush1.bf16.xpose.msra.mxu0 0
    %607 = vmatprep.subr.bf16.mxu0 0
    %608 = vmatpush1.bf16.xpose.msra.mxu0 0
    %609 = vmatprep.subr.bf16.mxu0 0
    %610 = vmatpush1.bf16.xpose.msra.mxu0 0
    %611 = vmatprep.subr.bf16.mxu0 0
    %612 = vmatpush1.bf16.xpose.msra.mxu0 0
    %613 = vmatprep.subr.bf16.mxu0 0
    %614 = vmatpush1.bf16.xpose.msra.mxu0 0
    %615 = vmatprep.subr.bf16.mxu0 0
    %616 = vmatpush1.bf16.xpose.msra.mxu0 0
    %617 = vmatprep.subr.bf16.mxu0 0
    %618 = vmatpush1.bf16.xpose.msra.mxu0 0
    %619 = vmatprep.subr.bf16.mxu0 0
    %620 = vmatpush1.bf16.xpose.msra.mxu0 0
    %621 = vmatprep.subr.bf16.mxu0 0
    %622 = vmatpush1.bf16.xpose.msra.mxu0 0
    %623 = vmatprep.subr.bf16.mxu0 0
    %624 = vmatpush1.bf16.xpose.msra.mxu0 0
    %625 = vmatprep.mubr.bf16.mxu0 0
    %626 = vmatmul.mubr.bf16.gmra.mrb[0].mxu0 %v588
    %v627 = vpop.f32.mrb[0].mxu0
    %v628 = vadd.f32 %v475, %v627
    %v629 = vpop.f32.mrb[0].mxu0
    %v630 = vpop.f32.mrb[0].mxu0
    %v631 = vpop.f32.mrb[0].mxu0
    %632 = vdwg.mxu0
    %634 = vrot.lane.b32.xlu0 %v480, 120
    %v635 = vpop.permute.xlu0 %634
    %v637 = vsel %vm488, %v480, 0
    %v640 = vsel %vm488, %v635, 0
    %642 = vmatprep.subr.bf16.mxu0 0
    %643 = vmatpush1.bf16.xpose.msra.mxu0 %v640
    %644 = vmatprep.subr.bf16.mxu0 0
    %645 = vmatpush1.bf16.xpose.msra.mxu0 0
    %646 = vmatprep.subr.bf16.mxu0 0
    %647 = vmatpush1.bf16.xpose.msra.mxu0 0
    %648 = vmatprep.subr.bf16.mxu0 0
    %649 = vmatpush1.bf16.xpose.msra.mxu0 0
    %650 = vmatprep.subr.bf16.mxu0 0
    %651 = vmatpush1.bf16.xpose.msra.mxu0 0
    %652 = vmatprep.subr.bf16.mxu0 0
    %653 = vmatpush1.bf16.xpose.msra.mxu0 0
    %654 = vmatprep.subr.bf16.mxu0 0
    %655 = vmatpush1.bf16.xpose.msra.mxu0 0
    %656 = vmatprep.subr.bf16.mxu0 0
    %657 = vmatpush1.bf16.xpose.msra.mxu0 0
    %658 = vmatprep.subr.bf16.mxu0 0
    %659 = vmatpush1.bf16.xpose.msra.mxu0 0
    %660 = vmatprep.subr.bf16.mxu0 0
    %661 = vmatpush1.bf16.xpose.msra.mxu0 0
    %662 = vmatprep.subr.bf16.mxu0 0
    %663 = vmatpush1.bf16.xpose.msra.mxu0 0
    %664 = vmatprep.subr.bf16.mxu0 0
    %665 = vmatpush1.bf16.xpose.msra.mxu0 0
    %666 = vmatprep.subr.bf16.mxu0 0
    %667 = vmatpush1.bf16.xpose.msra.mxu0 0
    %668 = vmatprep.subr.bf16.mxu0 0
    %669 = vmatpush1.bf16.xpose.msra.mxu0 0
    %670 = vmatprep.subr.bf16.mxu0 0
    %671 = vmatpush1.bf16.xpose.msra.mxu0 0
    %672 = vmatprep.subr.bf16.mxu0 0
    %673 = vmatpush1.bf16.xpose.msra.mxu0 0
    %674 = vmatprep.mubr.bf16.mxu0 0
    %675 = vmatmul.mubr.bf16.gmra.mrb[0].mxu0 %v637
    %v676 = vpop.f32.mrb[0].mxu0
    %v677 = vadd.f32 %v475, %v676
    %v678 = vpop.f32.mrb[0].mxu0
    %v679 = vpop.f32.mrb[0].mxu0
    %v680 = vpop.f32.mrb[0].mxu0
    %681 = vdwg.mxu0
    %683 = vrot.lane.b32.xlu0 %v481, 120
    %v684 = vpop.permute.xlu0 %683
    %v686 = vsel %vm488, %v481, 0
    %v689 = vsel %vm488, %v684, 0
    %691 = vmatprep.subr.bf16.mxu0 0
    %692 = vmatpush1.bf16.xpose.msra.mxu0 %v689
    %693 = vmatprep.subr.bf16.mxu0 0
    %694 = vmatpush1.bf16.xpose.msra.mxu0 0
    %695 = vmatprep.subr.bf16.mxu0 0
    %696 = vmatpush1.bf16.xpose.msra.mxu0 0
    %697 = vmatprep.subr.bf16.mxu0 0
    %698 = vmatpush1.bf16.xpose.msra.mxu0 0
    %699 = vmatprep.subr.bf16.mxu0 0
    %700 = vmatpush1.bf16.xpose.msra.mxu0 0
    %701 = vmatprep.subr.bf16.mxu0 0
    %702 = vmatpush1.bf16.xpose.msra.mxu0 0
    %703 = vmatprep.subr.bf16.mxu0 0
    %704 = vmatpush1.bf16.xpose.msra.mxu0 0
    %705 = vmatprep.subr.bf16.mxu0 0
    %706 = vmatpush1.bf16.xpose.msra.mxu0 0
    %707 = vmatprep.subr.bf16.mxu0 0
    %708 = vmatpush1.bf16.xpose.msra.mxu0 0
    %709 = vmatprep.subr.bf16.mxu0 0
    %710 = vmatpush1.bf16.xpose.msra.mxu0 0
    %711 = vmatprep.subr.bf16.mxu0 0
    %712 = vmatpush1.bf16.xpose.msra.mxu0 0
    %713 = vmatprep.subr.bf16.mxu0 0
    %714 = vmatpush1.bf16.xpose.msra.mxu0 0
    %715 = vmatprep.subr.bf16.mxu0 0
    %716 = vmatpush1.bf16.xpose.msra.mxu0 0
    %717 = vmatprep.subr.bf16.mxu0 0
    %718 = vmatpush1.bf16.xpose.msra.mxu0 0
    %719 = vmatprep.subr.bf16.mxu0 0
    %720 = vmatpush1.bf16.xpose.msra.mxu0 0
    %721 = vmatprep.subr.bf16.mxu0 0
    %722 = vmatpush1.bf16.xpose.msra.mxu0 0
    %723 = vmatprep.mubr.bf16.mxu0 0
    %724 = vmatmul.mubr.bf16.gmra.mrb[0].mxu0 %v686
    %v725 = vpop.f32.mrb[0].mxu0
    %v726 = vadd.f32 %v476, %v725
    %v727 = vpop.f32.mrb[0].mxu0
    %v728 = vpop.f32.mrb[0].mxu0
    %v729 = vpop.f32.mrb[0].mxu0
    %730 = vdwg.mxu0
    %732 = vrot.lane.b32.xlu0 %v482, 120
    %v733 = vpop.permute.xlu0 %732
    %v735 = vsel %vm488, %v482, 0
    %v738 = vsel %vm488, %v733, 0
    %740 = vmatprep.subr.bf16.mxu0 0
    %741 = vmatpush1.bf16.xpose.msra.mxu0 %v738
    %742 = vmatprep.subr.bf16.mxu0 0
    %743 = vmatpush1.bf16.xpose.msra.mxu0 0
    %744 = vmatprep.subr.bf16.mxu0 0
    %745 = vmatpush1.bf16.xpose.msra.mxu0 0
    %746 = vmatprep.subr.bf16.mxu0 0
    %747 = vmatpush1.bf16.xpose.msra.mxu0 0
    %748 = vmatprep.subr.bf16.mxu0 0
    %749 = vmatpush1.bf16.xpose.msra.mxu0 0
    %750 = vmatprep.subr.bf16.mxu0 0
    %751 = vmatpush1.bf16.xpose.msra.mxu0 0
    %752 = vmatprep.subr.bf16.mxu0 0
    %753 = vmatpush1.bf16.xpose.msra.mxu0 0
    %754 = vmatprep.subr.bf16.mxu0 0
    %755 = vmatpush1.bf16.xpose.msra.mxu0 0
    %756 = vmatprep.subr.bf16.mxu0 0
    %757 = vmatpush1.bf16.xpose.msra.mxu0 0
    %758 = vmatprep.subr.bf16.mxu0 0
    %759 = vmatpush1.bf16.xpose.msra.mxu0 0
    %760 = vmatprep.subr.bf16.mxu0 0
    %761 = vmatpush1.bf16.xpose.msra.mxu0 0
    %762 = vmatprep.subr.bf16.mxu0 0
    %763 = vmatpush1.bf16.xpose.msra.mxu0 0
    %764 = vmatprep.subr.bf16.mxu0 0
    %765 = vmatpush1.bf16.xpose.msra.mxu0 0
    %766 = vmatprep.subr.bf16.mxu0 0
    %767 = vmatpush1.bf16.xpose.msra.mxu0 0
    %768 = vmatprep.subr.bf16.mxu0 0
    %769 = vmatpush1.bf16.xpose.msra.mxu0 0
    %770 = vmatprep.subr.bf16.mxu0 0
    %771 = vmatpush1.bf16.xpose.msra.mxu0 0
    %772 = vmatprep.mubr.bf16.mxu0 0
    %773 = vmatmul.mubr.bf16.gmra.mrb[0].mxu0 %v735
    %v774 = vpop.f32.mrb[0].mxu0
    %v775 = vadd.f32 %v476, %v774
    %v776 = vpop.f32.mrb[0].mxu0
    %v777 = vpop.f32.mrb[0].mxu0
    %v778 = vpop.f32.mrb[0].mxu0
    %779 = vdwg.mxu0
    %781 = vrot.lane.b32.xlu0 %v483, 120
    %v782 = vpop.permute.xlu0 %781
    %v784 = vsel %vm488, %v483, 0
    %v787 = vsel %vm488, %v782, 0
    %789 = vmatprep.subr.bf16.mxu0 0
    %790 = vmatpush1.bf16.xpose.msra.mxu0 %v787
    %791 = vmatprep.subr.bf16.mxu0 0
    %792 = vmatpush1.bf16.xpose.msra.mxu0 0
    %793 = vmatprep.subr.bf16.mxu0 0
    %794 = vmatpush1.bf16.xpose.msra.mxu0 0
    %795 = vmatprep.subr.bf16.mxu0 0
    %796 = vmatpush1.bf16.xpose.msra.mxu0 0
    %797 = vmatprep.subr.bf16.mxu0 0
    %798 = vmatpush1.bf16.xpose.msra.mxu0 0
    %799 = vmatprep.subr.bf16.mxu0 0
    %800 = vmatpush1.bf16.xpose.msra.mxu0 0
    %801 = vmatprep.subr.bf16.mxu0 0
    %802 = vmatpush1.bf16.xpose.msra.mxu0 0
    %803 = vmatprep.subr.bf16.mxu0 0
    %804 = vmatpush1.bf16.xpose.msra.mxu0 0
    %805 = vmatprep.subr.bf16.mxu0 0
    %806 = vmatpush1.bf16.xpose.msra.mxu0 0
    %807 = vmatprep.subr.bf16.mxu0 0
    %808 = vmatpush1.bf16.xpose.msra.mxu0 0
    %809 = vmatprep.subr.bf16.mxu0 0
    %810 = vmatpush1.bf16.xpose.msra.mxu0 0
    %811 = vmatprep.subr.bf16.mxu0 0
    %812 = vmatpush1.bf16.xpose.msra.mxu0 0
    %813 = vmatprep.subr.bf16.mxu0 0
    %814 = vmatpush1.bf16.xpose.msra.mxu0 0
    %815 = vmatprep.subr.bf16.mxu0 0
    %816 = vmatpush1.bf16.xpose.msra.mxu0 0
    %817 = vmatprep.subr.bf16.mxu0 0
    %818 = vmatpush1.bf16.xpose.msra.mxu0 0
    %819 = vmatprep.subr.bf16.mxu0 0
    %820 = vmatpush1.bf16.xpose.msra.mxu0 0
    %821 = vmatprep.mubr.bf16.mxu0 0
    %822 = vmatmul.mubr.bf16.gmra.mrb[0].mxu0 %v784
    %v823 = vpop.f32.mrb[0].mxu0
    %v824 = vadd.f32 %v476, %v823
    %v825 = vpop.f32.mrb[0].mxu0
    %v826 = vpop.f32.mrb[0].mxu0
    %v827 = vpop.f32.mrb[0].mxu0
    %828 = vdwg.mxu0
    %830 = vrot.lane.b32.xlu0 %v484, 120
    %v831 = vpop.permute.xlu0 %830
    %v833 = vsel %vm488, %v484, 0
    %v836 = vsel %vm488, %v831, 0
    %838 = vmatprep.subr.bf16.mxu0 0
    %839 = vmatpush1.bf16.xpose.msra.mxu0 %v836
    %840 = vmatprep.subr.bf16.mxu0 0
    %841 = vmatpush1.bf16.xpose.msra.mxu0 0
    %842 = vmatprep.subr.bf16.mxu0 0
    %843 = vmatpush1.bf16.xpose.msra.mxu0 0
    %844 = vmatprep.subr.bf16.mxu0 0
    %845 = vmatpush1.bf16.xpose.msra.mxu0 0
    %846 = vmatprep.subr.bf16.mxu0 0
    %847 = vmatpush1.bf16.xpose.msra.mxu0 0
    %848 = vmatprep.subr.bf16.mxu0 0
    %849 = vmatpush1.bf16.xpose.msra.mxu0 0
    %850 = vmatprep.subr.bf16.mxu0 0
    %851 = vmatpush1.bf16.xpose.msra.mxu0 0
    %852 = vmatprep.subr.bf16.mxu0 0
    %853 = vmatpush1.bf16.xpose.msra.mxu0 0
    %854 = vmatprep.subr.bf16.mxu0 0
    %855 = vmatpush1.bf16.xpose.msra.mxu0 0
    %856 = vmatprep.subr.bf16.mxu0 0
    %857 = vmatpush1.bf16.xpose.msra.mxu0 0
    %858 = vmatprep.subr.bf16.mxu0 0
    %859 = vmatpush1.bf16.xpose.msra.mxu0 0
    %860 = vmatprep.subr.bf16.mxu0 0
    %861 = vmatpush1.bf16.xpose.msra.mxu0 0
    %862 = vmatprep.subr.bf16.mxu0 0
    %863 = vmatpush1.bf16.xpose.msra.mxu0 0
    %864 = vmatprep.subr.bf16.mxu0 0
    %865 = vmatpush1.bf16.xpose.msra.mxu0 0
    %866 = vmatprep.subr.bf16.mxu0 0
    %867 = vmatpush1.bf16.xpose.msra.mxu0 0
    %868 = vmatprep.subr.bf16.mxu0 0
    %869 = vmatpush1.bf16.xpose.msra.mxu0 0
    %870 = vmatprep.mubr.bf16.mxu0 0
    %871 = vmatmul.mubr.bf16.gmra.mrb[0].mxu0 %v833
    %v872 = vpop.f32.mrb[0].mxu0
    %v873 = vadd.f32 %v476, %v872
    %v874 = vpop.f32.mrb[0].mxu0
    %v875 = vpop.f32.mrb[0].mxu0
    %v876 = vpop.f32.mrb[0].mxu0
    %877 = vdwg.mxu0
    %v878 = vsel %vm488, %v530, -inf
    %879 = vmax.xlane.f32.xlu0 %v878
    %v880 = vpop.xlane.xlu0 %879
    %v881 = vsel %vm488, %v579, -inf
    %882 = vmax.xlane.f32.xlu0 %v881
    %v883 = vpop.xlane.xlu0 %882
    %v884 = vsel %vm488, %v628, -inf
    %885 = vmax.xlane.f32.xlu0 %v884
    %v886 = vpop.xlane.xlu0 %885
    %v887 = vsel %vm488, %v677, -inf
    %888 = vmax.xlane.f32.xlu0 %v887
    %v889 = vpop.xlane.xlu0 %888
    %v890 = vsel %vm488, %v726, -inf
    %891 = vmax.xlane.f32.xlu0 %v890
    %v892 = vpop.xlane.xlu0 %891
    %v893 = vsel %vm488, %v775, -inf
    %894 = vmax.xlane.f32.xlu0 %v893
    %v895 = vpop.xlane.xlu0 %894
    %v896 = vsel %vm488, %v824, -inf
    %897 = vmax.xlane.f32.xlu0 %v896
    %v898 = vpop.xlane.xlu0 %897
    %v899 = vsel %vm488, %v873, -inf
    %900 = vmax.xlane.f32.xlu0 %v899
    %v901 = vpop.xlane.xlu0 %900
    %v902 = vsub.f32 %v530, %v880
    %v903 = vsub.f32 %v579, %v883
    %v904 = vsub.f32 %v628, %v886
    %v905 = vsub.f32 %v677, %v889
    %v906 = vsub.f32 %v726, %v892
    %v907 = vsub.f32 %v775, %v895
    %v908 = vsub.f32 %v824, %v898
    %v909 = vsub.f32 %v873, %v901
    %v910 = vmul.f32 %v902, 1.442695
    %v911 = vpow.pop %v910
    %v912 = vmul.f32 %v903, 1.442695
    %v913 = vpow.pop %v912
    %v914 = vmul.f32 %v904, 1.442695
    %v915 = vpow.pop %v914
    %v916 = vmul.f32 %v905, 1.442695
    %v917 = vpow.pop %v916
    %v918 = vmul.f32 %v906, 1.442695
    %v919 = vpow.pop %v918
    %v920 = vmul.f32 %v907, 1.442695
    %v921 = vpow.pop %v920
    %v922 = vmul.f32 %v908, 1.442695
    %v923 = vpow.pop %v922
    %v924 = vmul.f32 %v909, 1.442695
    %v925 = vpow.pop %v924
    %v926 = vsel %vm488, %v911, 0.0
    %927 = vadd.xlane.f32.xlu0 %v926
    %v928 = vpop.xlane.xlu0 %927
    %v929 = vsel %vm488, %v913, 0.0
    %930 = vadd.xlane.f32.xlu0 %v929
    %v931 = vpop.xlane.xlu0 %930
    %v932 = vsel %vm488, %v915, 0.0
    %933 = vadd.xlane.f32.xlu0 %v932
    %v934 = vpop.xlane.xlu0 %933
    %v935 = vsel %vm488, %v917, 0.0
    %936 = vadd.xlane.f32.xlu0 %v935
    %v937 = vpop.xlane.xlu0 %936
    %v938 = vsel %vm488, %v919, 0.0
    %939 = vadd.xlane.f32.xlu0 %v938
    %v940 = vpop.xlane.xlu0 %939
    %v941 = vsel %vm488, %v921, 0.0
    %942 = vadd.xlane.f32.xlu0 %v941
    %v943 = vpop.xlane.xlu0 %942
    %v944 = vsel %vm488, %v923, 0.0
    %945 = vadd.xlane.f32.xlu0 %v944
    %v946 = vpop.xlane.xlu0 %945
    %v947 = vsel %vm488, %v925, 0.0
    %948 = vadd.xlane.f32.xlu0 %v947
    %v949 = vpop.xlane.xlu0 %948
    %v950 = vrcp.pop %v928
    %v951 = vmul.f32 %v911, %v950
    %v952 = vrcp.pop %v931
    %v953 = vmul.f32 %v913, %v952
    %v954 = vrcp.pop %v934
    %v955 = vmul.f32 %v915, %v954
    %v956 = vrcp.pop %v937
    %v957 = vmul.f32 %v917, %v956
    %v958 = vrcp.pop %v940
    %v959 = vmul.f32 %v919, %v958
    %v960 = vrcp.pop %v943
    %v961 = vmul.f32 %v921, %v960
    %v962 = vrcp.pop %v946
    %v963 = vmul.f32 %v923, %v962
    %v964 = vrcp.pop %v949
    %v965 = vmul.f32 %v925, %v964
    %v966 = vpack.c.bf16 %v951, %v951
    %v967 = vpack.c.bf16 %v953, %v953
    %v968 = vpack.c.bf16 %v955, %v955
    %v969 = vpack.c.bf16 %v957, %v957
    %v970 = vpack.c.bf16 %v959, %v959
    %v971 = vpack.c.bf16 %v961, %v961
    %v972 = vpack.c.bf16 %v963, %v963
    %v973 = vpack.c.bf16 %v965, %v965
    %974 = vrot.lane.b32.xlu0 %v477, 112
    %v975 = vpop.permute.xlu0 %974
    %v977 = vsel %vm488, %v966, 0
    %vm979 = vcmask 1043456
    %v981 = vsel %vm979, %v975, 0
    %983 = vmatprep.subr.bf16.mxu0 0
    %984 = vmatpush1.bf16.msra.mxu0 %v981
    %985 = vmatprep.subr.bf16.mxu0 0
    %986 = vmatpush1.bf16.msra.mxu0 0
    %987 = vmatprep.subr.bf16.mxu0 0
    %988 = vmatpush1.bf16.msra.mxu0 0
    %989 = vmatprep.subr.bf16.mxu0 0
    %990 = vmatpush1.bf16.msra.mxu0 0
    %991 = vmatprep.subr.bf16.mxu0 0
    %992 = vmatpush1.bf16.msra.mxu0 0
    %993 = vmatprep.subr.bf16.mxu0 0
    %994 = vmatpush1.bf16.msra.mxu0 0
    %995 = vmatprep.subr.bf16.mxu0 0
    %996 = vmatpush1.bf16.msra.mxu0 0
    %997 = vmatprep.subr.bf16.mxu0 0
    %998 = vmatpush1.bf16.msra.mxu0 0
    %999 = vmatprep.subr.bf16.mxu0 0
    %1000 = vmatpush1.bf16.msra.mxu0 0
    %1001 = vmatprep.subr.bf16.mxu0 0
    %1002 = vmatpush1.bf16.msra.mxu0 0
    %1003 = vmatprep.subr.bf16.mxu0 0
    %1004 = vmatpush1.bf16.msra.mxu0 0
    %1005 = vmatprep.subr.bf16.mxu0 0
    %1006 = vmatpush1.bf16.msra.mxu0 0
    %1007 = vmatprep.subr.bf16.mxu0 0
    %1008 = vmatpush1.bf16.msra.mxu0 0
    %1009 = vmatprep.subr.bf16.mxu0 0
    %1010 = vmatpush1.bf16.msra.mxu0 0
    %1011 = vmatprep.subr.bf16.mxu0 0
    %1012 = vmatpush1.bf16.msra.mxu0 0
    %1013 = vmatprep.subr.bf16.mxu0 0
    %1014 = vmatpush1.bf16.msra.mxu0 0
    %1015 = vmatprep.mubr.bf16.mxu0 0
    %1016 = vmatmul.mubr.bf16.gmra.mrb[0].mxu0 %v977
    %v1017 = vpop.f32.mrb[0].mxu0
    %v1018 = vadd.f32 0.0, %v1017
    %v1019 = vpop.f32.mrb[0].mxu0
    %v1020 = vpop.f32.mrb[0].mxu0
    %v1021 = vpop.f32.mrb[0].mxu0
    %1022 = vdwg.mxu0
    %1023 = vrot.lane.b32.xlu0 %v478, 112
    %v1024 = vpop.permute.xlu0 %1023
    %v1026 = vsel %vm488, %v967, 0
    %v1029 = vsel %vm979, %v1024, 0
    %1031 = vmatprep.subr.bf16.mxu0 0
    %1032 = vmatpush1.bf16.msra.mxu0 %v1029
    %1033 = vmatprep.subr.bf16.mxu0 0
    %1034 = vmatpush1.bf16.msra.mxu0 0
    %1035 = vmatprep.subr.bf16.mxu0 0
    %1036 = vmatpush1.bf16.msra.mxu0 0
    %1037 = vmatprep.subr.bf16.mxu0 0
    %1038 = vmatpush1.bf16.msra.mxu0 0
    %1039 = vmatprep.subr.bf16.mxu0 0
    %1040 = vmatpush1.bf16.msra.mxu0 0
    %1041 = vmatprep.subr.bf16.mxu0 0
    %1042 = vmatpush1.bf16.msra.mxu0 0
    %1043 = vmatprep.subr.bf16.mxu0 0
    %1044 = vmatpush1.bf16.msra.mxu0 0
    %1045 = vmatprep.subr.bf16.mxu0 0
    %1046 = vmatpush1.bf16.msra.mxu0 0
    %1047 = vmatprep.subr.bf16.mxu0 0
    %1048 = vmatpush1.bf16.msra.mxu0 0
    %1049 = vmatprep.subr.bf16.mxu0 0
    %1050 = vmatpush1.bf16.msra.mxu0 0
    %1051 = vmatprep.subr.bf16.mxu0 0
    %1052 = vmatpush1.bf16.msra.mxu0 0
    %1053 = vmatprep.subr.bf16.mxu0 0
    %1054 = vmatpush1.bf16.msra.mxu0 0
    %1055 = vmatprep.subr.bf16.mxu0 0
    %1056 = vmatpush1.bf16.msra.mxu0 0
    %1057 = vmatprep.subr.bf16.mxu0 0
    %1058 = vmatpush1.bf16.msra.mxu0 0
    %1059 = vmatprep.subr.bf16.mxu0 0
    %1060 = vmatpush1.bf16.msra.mxu0 0
    %1061 = vmatprep.subr.bf16.mxu0 0
    %1062 = vmatpush1.bf16.msra.mxu0 0
    %1063 = vmatprep.mubr.bf16.mxu0 0
    %1064 = vmatmul.mubr.bf16.gmra.mrb[0].mxu0 %v1026
    %v1065 = vpop.f32.mrb[0].mxu0
    %v1066 = vadd.f32 0.0, %v1065
    %v1067 = vpop.f32.mrb[0].mxu0
    %v1068 = vpop.f32.mrb[0].mxu0
    %v1069 = vpop.f32.mrb[0].mxu0
    %1070 = vdwg.mxu0
    %1071 = vrot.lane.b32.xlu0 %v479, 112
    %v1072 = vpop.permute.xlu0 %1071
    %v1074 = vsel %vm488, %v968, 0
    %v1077 = vsel %vm979, %v1072, 0
    %1079 = vmatprep.subr.bf16.mxu0 0
    %1080 = vmatpush1.bf16.msra.mxu0 %v1077
    %1081 = vmatprep.subr.bf16.mxu0 0
    %1082 = vmatpush1.bf16.msra.mxu0 0
    %1083 = vmatprep.subr.bf16.mxu0 0
    %1084 = vmatpush1.bf16.msra.mxu0 0
    %1085 = vmatprep.subr.bf16.mxu0 0
    %1086 = vmatpush1.bf16.msra.mxu0 0
    %1087 = vmatprep.subr.bf16.mxu0 0
    %1088 = vmatpush1.bf16.msra.mxu0 0
    %1089 = vmatprep.subr.bf16.mxu0 0
    %1090 = vmatpush1.bf16.msra.mxu0 0
    %1091 = vmatprep.subr.bf16.mxu0 0
    %1092 = vmatpush1.bf16.msra.mxu0 0
    %1093 = vmatprep.subr.bf16.mxu0 0
    %1094 = vmatpush1.bf16.msra.mxu0 0
    %1095 = vmatprep.subr.bf16.mxu0 0
    %1096 = vmatpush1.bf16.msra.mxu0 0
    %1097 = vmatprep.subr.bf16.mxu0 0
    %1098 = vmatpush1.bf16.msra.mxu0 0
    %1099 = vmatprep.subr.bf16.mxu0 0
    %1100 = vmatpush1.bf16.msra.mxu0 0
    %1101 = vmatprep.subr.bf16.mxu0 0
    %1102 = vmatpush1.bf16.msra.mxu0 0
    %1103 = vmatprep.subr.bf16.mxu0 0
    %1104 = vmatpush1.bf16.msra.mxu0 0
    %1105 = vmatprep.subr.bf16.mxu0 0
    %1106 = vmatpush1.bf16.msra.mxu0 0
    %1107 = vmatprep.subr.bf16.mxu0 0
    %1108 = vmatpush1.bf16.msra.mxu0 0
    %1109 = vmatprep.subr.bf16.mxu0 0
    %1110 = vmatpush1.bf16.msra.mxu0 0
    %1111 = vmatprep.mubr.bf16.mxu0 0
    %1112 = vmatmul.mubr.bf16.gmra.mrb[0].mxu0 %v1074
    %v1113 = vpop.f32.mrb[0].mxu0
    %v1114 = vadd.f32 0.0, %v1113
    %v1115 = vpop.f32.mrb[0].mxu0
    %v1116 = vpop.f32.mrb[0].mxu0
    %v1117 = vpop.f32.mrb[0].mxu0
    %1118 = vdwg.mxu0
    %1119 = vrot.lane.b32.xlu0 %v480, 112
    %v1120 = vpop.permute.xlu0 %1119
    %v1122 = vsel %vm488, %v969, 0
    %v1125 = vsel %vm979, %v1120, 0
    %1127 = vmatprep.subr.bf16.mxu0 0
    %1128 = vmatpush1.bf16.msra.mxu0 %v1125
    %1129 = vmatprep.subr.bf16.mxu0 0
    %1130 = vmatpush1.bf16.msra.mxu0 0
    %1131 = vmatprep.subr.bf16.mxu0 0
    %1132 = vmatpush1.bf16.msra.mxu0 0
    %1133 = vmatprep.subr.bf16.mxu0 0
    %1134 = vmatpush1.bf16.msra.mxu0 0
    %1135 = vmatprep.subr.bf16.mxu0 0
    %1136 = vmatpush1.bf16.msra.mxu0 0
    %1137 = vmatprep.subr.bf16.mxu0 0
    %1138 = vmatpush1.bf16.msra.mxu0 0
    %1139 = vmatprep.subr.bf16.mxu0 0
    %1140 = vmatpush1.bf16.msra.mxu0 0
    %1141 = vmatprep.subr.bf16.mxu0 0
    %1142 = vmatpush1.bf16.msra.mxu0 0
    %1143 = vmatprep.subr.bf16.mxu0 0
    %1144 = vmatpush1.bf16.msra.mxu0 0
    %1145 = vmatprep.subr.bf16.mxu0 0
    %1146 = vmatpush1.bf16.msra.mxu0 0
    %1147 = vmatprep.subr.bf16.mxu0 0
    %1148 = vmatpush1.bf16.msra.mxu0 0
    %1149 = vmatprep.subr.bf16.mxu0 0
    %1150 = vmatpush1.bf16.msra.mxu0 0
    %1151 = vmatprep.subr.bf16.mxu0 0
    %1152 = vmatpush1.bf16.msra.mxu0 0
    %1153 = vmatprep.subr.bf16.mxu0 0
    %1154 = vmatpush1.bf16.msra.mxu0 0
    %1155 = vmatprep.subr.bf16.mxu0 0
    %1156 = vmatpush1.bf16.msra.mxu0 0
    %1157 = vmatprep.subr.bf16.mxu0 0
    %1158 = vmatpush1.bf16.msra.mxu0 0
    %1159 = vmatprep.mubr.bf16.mxu0 0
    %1160 = vmatmul.mubr.bf16.gmra.mrb[0].mxu0 %v1122
    %v1161 = vpop.f32.mrb[0].mxu0
    %v1162 = vadd.f32 0.0, %v1161
    %v1163 = vpop.f32.mrb[0].mxu0
    %v1164 = vpop.f32.mrb[0].mxu0
    %v1165 = vpop.f32.mrb[0].mxu0
    %1166 = vdwg.mxu0
    %1167 = vrot.lane.b32.xlu0 %v481, 112
    %v1168 = vpop.permute.xlu0 %1167
    %v1170 = vsel %vm488, %v970, 0
    %v1173 = vsel %vm979, %v1168, 0
    %1175 = vmatprep.subr.bf16.mxu0 0
    %1176 = vmatpush1.bf16.msra.mxu0 %v1173
    %1177 = vmatprep.subr.bf16.mxu0 0
    %1178 = vmatpush1.bf16.msra.mxu0 0
    %1179 = vmatprep.subr.bf16.mxu0 0
    %1180 = vmatpush1.bf16.msra.mxu0 0
    %1181 = vmatprep.subr.bf16.mxu0 0
    %1182 = vmatpush1.bf16.msra.mxu0 0
    %1183 = vmatprep.subr.bf16.mxu0 0
    %1184 = vmatpush1.bf16.msra.mxu0 0
    %1185 = vmatprep.subr.bf16.mxu0 0
    %1186 = vmatpush1.bf16.msra.mxu0 0
    %1187 = vmatprep.subr.bf16.mxu0 0
    %1188 = vmatpush1.bf16.msra.mxu0 0
    %1189 = vmatprep.subr.bf16.mxu0 0
    %1190 = vmatpush1.bf16.msra.mxu0 0
    %1191 = vmatprep.subr.bf16.mxu0 0
    %1192 = vmatpush1.bf16.msra.mxu0 0
    %1193 = vmatprep.subr.bf16.mxu0 0
    %1194 = vmatpush1.bf16.msra.mxu0 0
    %1195 = vmatprep.subr.bf16.mxu0 0
    %1196 = vmatpush1.bf16.msra.mxu0 0
    %1197 = vmatprep.subr.bf16.mxu0 0
    %1198 = vmatpush1.bf16.msra.mxu0 0
    %1199 = vmatprep.subr.bf16.mxu0 0
    %1200 = vmatpush1.bf16.msra.mxu0 0
    %1201 = vmatprep.subr.bf16.mxu0 0
    %1202 = vmatpush1.bf16.msra.mxu0 0
    %1203 = vmatprep.subr.bf16.mxu0 0
    %1204 = vmatpush1.bf16.msra.mxu0 0
    %1205 = vmatprep.subr.bf16.mxu0 0
    %1206 = vmatpush1.bf16.msra.mxu0 0
    %1207 = vmatprep.mubr.bf16.mxu0 0
    %1208 = vmatmul.mubr.bf16.gmra.mrb[0].mxu0 %v1170
    %v1209 = vpop.f32.mrb[0].mxu0
    %v1210 = vadd.f32 0.0, %v1209
    %v1211 = vpop.f32.mrb[0].mxu0
    %v1212 = vpop.f32.mrb[0].mxu0
    %v1213 = vpop.f32.mrb[0].mxu0
    %1214 = vdwg.mxu0
    %1215 = vrot.lane.b32.xlu0 %v482, 112
    %v1216 = vpop.permute.xlu0 %1215
    %v1218 = vsel %vm488, %v971, 0
    %v1221 = vsel %vm979, %v1216, 0
    %1223 = vmatprep.subr.bf16.mxu0 0
    %1224 = vmatpush1.bf16.msra.mxu0 %v1221
    %1225 = vmatprep.subr.bf16.mxu0 0
    %1226 = vmatpush1.bf16.msra.mxu0 0
    %1227 = vmatprep.subr.bf16.mxu0 0
    %1228 = vmatpush1.bf16.msra.mxu0 0
    %1229 = vmatprep.subr.bf16.mxu0 0
    %1230 = vmatpush1.bf16.msra.mxu0 0
    %1231 = vmatprep.subr.bf16.mxu0 0
    %1232 = vmatpush1.bf16.msra.mxu0 0
    %1233 = vmatprep.subr.bf16.mxu0 0
    %1234 = vmatpush1.bf16.msra.mxu0 0
    %1235 = vmatprep.subr.bf16.mxu0 0
    %1236 = vmatpush1.bf16.msra.mxu0 0
    %1237 = vmatprep.subr.bf16.mxu0 0
    %1238 = vmatpush1.bf16.msra.mxu0 0
    %1239 = vmatprep.subr.bf16.mxu0 0
    %1240 = vmatpush1.bf16.msra.mxu0 0
    %1241 = vmatprep.subr.bf16.mxu0 0
    %1242 = vmatpush1.bf16.msra.mxu0 0
    %1243 = vmatprep.subr.bf16.mxu0 0
    %1244 = vmatpush1.bf16.msra.mxu0 0
    %1245 = vmatprep.subr.bf16.mxu0 0
    %1246 = vmatpush1.bf16.msra.mxu0 0
    %1247 = vmatprep.subr.bf16.mxu0 0
    %1248 = vmatpush1.bf16.msra.mxu0 0
    %1249 = vmatprep.subr.bf16.mxu0 0
    %1250 = vmatpush1.bf16.msra.mxu0 0
    %1251 = vmatprep.subr.bf16.mxu0 0
    %1252 = vmatpush1.bf16.msra.mxu0 0
    %1253 = vmatprep.subr.bf16.mxu0 0
    %1254 = vmatpush1.bf16.msra.mxu0 0
    %1255 = vmatprep.mubr.bf16.mxu0 0
    %1256 = vmatmul.mubr.bf16.gmra.mrb[0].mxu0 %v1218
    %v1257 = vpop.f32.mrb[0].mxu0
    %v1258 = vadd.f32 0.0, %v1257
    %v1259 = vpop.f32.mrb[0].mxu0
    %v1260 = vpop.f32.mrb[0].mxu0
    %v1261 = vpop.f32.mrb[0].mxu0
    %1262 = vdwg.mxu0
    %1263 = vrot.lane.b32.xlu0 %v483, 112
    %v1264 = vpop.permute.xlu0 %1263
    %v1266 = vsel %vm488, %v972, 0
    %v1269 = vsel %vm979, %v1264, 0
    %1271 = vmatprep.subr.bf16.mxu0 0
    %1272 = vmatpush1.bf16.msra.mxu0 %v1269
    %1273 = vmatprep.subr.bf16.mxu0 0
    %1274 = vmatpush1.bf16.msra.mxu0 0
    %1275 = vmatprep.subr.bf16.mxu0 0
    %1276 = vmatpush1.bf16.msra.mxu0 0
    %1277 = vmatprep.subr.bf16.mxu0 0
    %1278 = vmatpush1.bf16.msra.mxu0 0
    %1279 = vmatprep.subr.bf16.mxu0 0
    %1280 = vmatpush1.bf16.msra.mxu0 0
    %1281 = vmatprep.subr.bf16.mxu0 0
    %1282 = vmatpush1.bf16.msra.mxu0 0
    %1283 = vmatprep.subr.bf16.mxu0 0
    %1284 = vmatpush1.bf16.msra.mxu0 0
    %1285 = vmatprep.subr.bf16.mxu0 0
    %1286 = vmatpush1.bf16.msra.mxu0 0
    %1287 = vmatprep.subr.bf16.mxu0 0
    %1288 = vmatpush1.bf16.msra.mxu0 0
    %1289 = vmatprep.subr.bf16.mxu0 0
    %1290 = vmatpush1.bf16.msra.mxu0 0
    %1291 = vmatprep.subr.bf16.mxu0 0
    %1292 = vmatpush1.bf16.msra.mxu0 0
    %1293 = vmatprep.subr.bf16.mxu0 0
    %1294 = vmatpush1.bf16.msra.mxu0 0
    %1295 = vmatprep.subr.bf16.mxu0 0
    %1296 = vmatpush1.bf16.msra.mxu0 0
    %1297 = vmatprep.subr.bf16.mxu0 0
    %1298 = vmatpush1.bf16.msra.mxu0 0
    %1299 = vmatprep.subr.bf16.mxu0 0
    %1300 = vmatpush1.bf16.msra.mxu0 0
    %1301 = vmatprep.subr.bf16.mxu0 0
    %1302 = vmatpush1.bf16.msra.mxu0 0
    %1303 = vmatprep.mubr.bf16.mxu0 0
    %1304 = vmatmul.mubr.bf16.gmra.mrb[0].mxu0 %v1266
    %v1305 = vpop.f32.mrb[0].mxu0
    %v1306 = vadd.f32 0.0, %v1305
    %v1307 = vpop.f32.mrb[0].mxu0
    %v1308 = vpop.f32.mrb[0].mxu0
    %v1309 = vpop.f32.mrb[0].mxu0
    %1310 = vdwg.mxu0
    %1311 = vrot.lane.b32.xlu0 %v484, 112
    %v1312 = vpop.permute.xlu0 %1311
    %v1314 = vsel %vm488, %v973, 0
    %v1317 = vsel %vm979, %v1312, 0
    %1319 = vmatprep.subr.bf16.mxu0 0
    %1320 = vmatpush1.bf16.msra.mxu0 %v1317
    %1321 = vmatprep.subr.bf16.mxu0 0
    %1322 = vmatpush1.bf16.msra.mxu0 0
    %1323 = vmatprep.subr.bf16.mxu0 0
    %1324 = vmatpush1.bf16.msra.mxu0 0
    %1325 = vmatprep.subr.bf16.mxu0 0
    %1326 = vmatpush1.bf16.msra.mxu0 0
    %1327 = vmatprep.subr.bf16.mxu0 0
    %1328 = vmatpush1.bf16.msra.mxu0 0
    %1329 = vmatprep.subr.bf16.mxu0 0
    %1330 = vmatpush1.bf16.msra.mxu0 0
    %1331 = vmatprep.subr.bf16.mxu0 0
    %1332 = vmatpush1.bf16.msra.mxu0 0
    %1333 = vmatprep.subr.bf16.mxu0 0
    %1334 = vmatpush1.bf16.msra.mxu0 0
    %1335 = vmatprep.subr.bf16.mxu0 0
    %1336 = vmatpush1.bf16.msra.mxu0 0
    %1337 = vmatprep.subr.bf16.mxu0 0
    %1338 = vmatpush1.bf16.msra.mxu0 0
    %1339 = vmatprep.subr.bf16.mxu0 0
    %1340 = vmatpush1.bf16.msra.mxu0 0
    %1341 = vmatprep.subr.bf16.mxu0 0
    %1342 = vmatpush1.bf16.msra.mxu0 0
    %1343 = vmatprep.subr.bf16.mxu0 0
    %1344 = vmatpush1.bf16.msra.mxu0 0
    %1345 = vmatprep.subr.bf16.mxu0 0
    %1346 = vmatpush1.bf16.msra.mxu0 0
    %1347 = vmatprep.subr.bf16.mxu0 0
    %1348 = vmatpush1.bf16.msra.mxu0 0
    %1349 = vmatprep.subr.bf16.mxu0 0
    %1350 = vmatpush1.bf16.msra.mxu0 0
    %1351 = vmatprep.mubr.bf16.mxu0 0
    %1352 = vmatmul.mubr.bf16.gmra.mrb[0].mxu0 %v1314
    %v1353 = vpop.f32.mrb[0].mxu0
    %v1354 = vadd.f32 0.0, %v1353
    %v1355 = vpop.f32.mrb[0].mxu0
    %v1356 = vpop.f32.mrb[0].mxu0
    %v1357 = vpop.f32.mrb[0].mxu0
    %1358 = vdwg.mxu0
    %v1359 = vpack.c.bf16 %v1018, %v1018
    %v1360 = vpack.c.bf16 %v1066, %v1066
    %v1361 = vpack.c.bf16 %v1114, %v1114
    %v1362 = vpack.c.bf16 %v1162, %v1162
    %v1363 = vpack.c.bf16 %v1210, %v1210
    %v1364 = vpack.c.bf16 %v1258, %v1258
    %v1365 = vpack.c.bf16 %v1306, %v1306
    %v1366 = vpack.c.bf16 %v1354, %v1354
    %v1367 = vpack.c.bf16 %v108, %v108
    %v1368 = vpack.c.bf16 %v109, %v109
    %v1369 = vpack.c.bf16 %v110, %v110
    %v1370 = vpack.c.bf16 %v111, %v111
    %v1371 = vpack.c.bf16 %v112, %v112
    %v1372 = vpack.c.bf16 %v113, %v113
    %v1373 = vpack.c.bf16 %v114, %v114
    %v1374 = vpack.c.bf16 %v115, %v115
    %v1376 = vsel %vm488, %v1359, 0
    %v1379 = vsel %vm979, %v1367, 0
    %1381 = vmatprep.subr.bf16.mxu0 0
    %1382 = vmatpush1.bf16.msra.mxu0 %v1379
    %1383 = vmatprep.subr.bf16.mxu0 0
    %1384 = vmatpush1.bf16.msra.mxu0 0
    %1385 = vmatprep.subr.bf16.mxu0 0
    %1386 = vmatpush1.bf16.msra.mxu0 0
    %1387 = vmatprep.subr.bf16.mxu0 0
    %1388 = vmatpush1.bf16.msra.mxu0 0
    %1389 = vmatprep.subr.bf16.mxu0 0
    %1390 = vmatpush1.bf16.msra.mxu0 0
    %1391 = vmatprep.subr.bf16.mxu0 0
    %1392 = vmatpush1.bf16.msra.mxu0 0
    %1393 = vmatprep.subr.bf16.mxu0 0
    %1394 = vmatpush1.bf16.msra.mxu0 0
    %1395 = vmatprep.subr.bf16.mxu0 0
    %1396 = vmatpush1.bf16.msra.mxu0 0
    %1397 = vmatprep.subr.bf16.mxu0 0
    %1398 = vmatpush1.bf16.msra.mxu0 0
    %1399 = vmatprep.subr.bf16.mxu0 0
    %1400 = vmatpush1.bf16.msra.mxu0 0
    %1401 = vmatprep.subr.bf16.mxu0 0
    %1402 = vmatpush1.bf16.msra.mxu0 0
    %1403 = vmatprep.subr.bf16.mxu0 0
    %1404 = vmatpush1.bf16.msra.mxu0 0
    %1405 = vmatprep.subr.bf16.mxu0 0
    %1406 = vmatpush1.bf16.msra.mxu0 0
    %1407 = vmatprep.subr.bf16.mxu0 0
    %1408 = vmatpush1.bf16.msra.mxu0 0
    %1409 = vmatprep.subr.bf16.mxu0 0
    %1410 = vmatpush1.bf16.msra.mxu0 0
    %1411 = vmatprep.subr.bf16.mxu0 0
    %1412 = vmatpush1.bf16.msra.mxu0 0
    %1413 = vmatprep.mubr.bf16.mxu0 0
    %1414 = vmatmul.mubr.bf16.gmra.mrb[0].mxu0 %v1376
    %v1415 = vpop.f32.mrb[0].mxu0
    %v1416 = vadd.f32 0.0, %v1415
    %v1417 = vpop.f32.mrb[0].mxu0
    %v1418 = vpop.f32.mrb[0].mxu0
    %v1419 = vpop.f32.mrb[0].mxu0
    %1420 = vdwg.mxu0
    %v1422 = vsel %vm488, %v1360, 0
    %v1425 = vsel %vm979, %v1368, 0
    %1427 = vmatprep.subr.bf16.mxu0 0
    %1428 = vmatpush1.bf16.msra.mxu0 %v1425
    %1429 = vmatprep.subr.bf16.mxu0 0
    %1430 = vmatpush1.bf16.msra.mxu0 0
    %1431 = vmatprep.subr.bf16.mxu0 0
    %1432 = vmatpush1.bf16.msra.mxu0 0
    %1433 = vmatprep.subr.bf16.mxu0 0
    %1434 = vmatpush1.bf16.msra.mxu0 0
    %1435 = vmatprep.subr.bf16.mxu0 0
    %1436 = vmatpush1.bf16.msra.mxu0 0
    %1437 = vmatprep.subr.bf16.mxu0 0
    %1438 = vmatpush1.bf16.msra.mxu0 0
    %1439 = vmatprep.subr.bf16.mxu0 0
    %1440 = vmatpush1.bf16.msra.mxu0 0
    %1441 = vmatprep.subr.bf16.mxu0 0
    %1442 = vmatpush1.bf16.msra.mxu0 0
    %1443 = vmatprep.subr.bf16.mxu0 0
    %1444 = vmatpush1.bf16.msra.mxu0 0
    %1445 = vmatprep.subr.bf16.mxu0 0
    %1446 = vmatpush1.bf16.msra.mxu0 0
    %1447 = vmatprep.subr.bf16.mxu0 0
    %1448 = vmatpush1.bf16.msra.mxu0 0
    %1449 = vmatprep.subr.bf16.mxu0 0
    %1450 = vmatpush1.bf16.msra.mxu0 0
    %1451 = vmatprep.subr.bf16.mxu0 0
    %1452 = vmatpush1.bf16.msra.mxu0 0
    %1453 = vmatprep.subr.bf16.mxu0 0
    %1454 = vmatpush1.bf16.msra.mxu0 0
    %1455 = vmatprep.subr.bf16.mxu0 0
    %1456 = vmatpush1.bf16.msra.mxu0 0
    %1457 = vmatprep.subr.bf16.mxu0 0
    %1458 = vmatpush1.bf16.msra.mxu0 0
    %1459 = vmatprep.mubr.bf16.mxu0 0
    %1460 = vmatmul.mubr.bf16.gmra.mrb[0].mxu0 %v1422
    %v1461 = vpop.f32.mrb[0].mxu0
    %v1462 = vadd.f32 0.0, %v1461
    %v1463 = vpop.f32.mrb[0].mxu0
    %v1464 = vpop.f32.mrb[0].mxu0
    %v1465 = vpop.f32.mrb[0].mxu0
    %1466 = vdwg.mxu0
    %v1468 = vsel %vm488, %v1361, 0
    %v1471 = vsel %vm979, %v1369, 0
    %1473 = vmatprep.subr.bf16.mxu0 0
    %1474 = vmatpush1.bf16.msra.mxu0 %v1471
    %1475 = vmatprep.subr.bf16.mxu0 0
    %1476 = vmatpush1.bf16.msra.mxu0 0
    %1477 = vmatprep.subr.bf16.mxu0 0
    %1478 = vmatpush1.bf16.msra.mxu0 0
    %1479 = vmatprep.subr.bf16.mxu0 0
    %1480 = vmatpush1.bf16.msra.mxu0 0
    %1481 = vmatprep.subr.bf16.mxu0 0
    %1482 = vmatpush1.bf16.msra.mxu0 0
    %1483 = vmatprep.subr.bf16.mxu0 0
    %1484 = vmatpush1.bf16.msra.mxu0 0
    %1485 = vmatprep.subr.bf16.mxu0 0
    %1486 = vmatpush1.bf16.msra.mxu0 0
    %1487 = vmatprep.subr.bf16.mxu0 0
    %1488 = vmatpush1.bf16.msra.mxu0 0
    %1489 = vmatprep.subr.bf16.mxu0 0
    %1490 = vmatpush1.bf16.msra.mxu0 0
    %1491 = vmatprep.subr.bf16.mxu0 0
    %1492 = vmatpush1.bf16.msra.mxu0 0
    %1493 = vmatprep.subr.bf16.mxu0 0
    %1494 = vmatpush1.bf16.msra.mxu0 0
    %1495 = vmatprep.subr.bf16.mxu0 0
    %1496 = vmatpush1.bf16.msra.mxu0 0
    %1497 = vmatprep.subr.bf16.mxu0 0
    %1498 = vmatpush1.bf16.msra.mxu0 0
    %1499 = vmatprep.subr.bf16.mxu0 0
    %1500 = vmatpush1.bf16.msra.mxu0 0
    %1501 = vmatprep.subr.bf16.mxu0 0
    %1502 = vmatpush1.bf16.msra.mxu0 0
    %1503 = vmatprep.subr.bf16.mxu0 0
    %1504 = vmatpush1.bf16.msra.mxu0 0
    %1505 = vmatprep.mubr.bf16.mxu0 0
    %1506 = vmatmul.mubr.bf16.gmra.mrb[0].mxu0 %v1468
    %v1507 = vpop.f32.mrb[0].mxu0
    %v1508 = vadd.f32 0.0, %v1507
    %v1509 = vpop.f32.mrb[0].mxu0
    %v1510 = vpop.f32.mrb[0].mxu0
    %v1511 = vpop.f32.mrb[0].mxu0
    %1512 = vdwg.mxu0
    %v1514 = vsel %vm488, %v1362, 0
    %v1517 = vsel %vm979, %v1370, 0
    %1519 = vmatprep.subr.bf16.mxu0 0
    %1520 = vmatpush1.bf16.msra.mxu0 %v1517
    %1521 = vmatprep.subr.bf16.mxu0 0
    %1522 = vmatpush1.bf16.msra.mxu0 0
    %1523 = vmatprep.subr.bf16.mxu0 0
    %1524 = vmatpush1.bf16.msra.mxu0 0
    %1525 = vmatprep.subr.bf16.mxu0 0
    %1526 = vmatpush1.bf16.msra.mxu0 0
    %1527 = vmatprep.subr.bf16.mxu0 0
    %1528 = vmatpush1.bf16.msra.mxu0 0
    %1529 = vmatprep.subr.bf16.mxu0 0
    %1530 = vmatpush1.bf16.msra.mxu0 0
    %1531 = vmatprep.subr.bf16.mxu0 0
    %1532 = vmatpush1.bf16.msra.mxu0 0
    %1533 = vmatprep.subr.bf16.mxu0 0
    %1534 = vmatpush1.bf16.msra.mxu0 0
    %1535 = vmatprep.subr.bf16.mxu0 0
    %1536 = vmatpush1.bf16.msra.mxu0 0
    %1537 = vmatprep.subr.bf16.mxu0 0
    %1538 = vmatpush1.bf16.msra.mxu0 0
    %1539 = vmatprep.subr.bf16.mxu0 0
    %1540 = vmatpush1.bf16.msra.mxu0 0
    %1541 = vmatprep.subr.bf16.mxu0 0
    %1542 = vmatpush1.bf16.msra.mxu0 0
    %1543 = vmatprep.subr.bf16.mxu0 0
    %1544 = vmatpush1.bf16.msra.mxu0 0
    %1545 = vmatprep.subr.bf16.mxu0 0
    %1546 = vmatpush1.bf16.msra.mxu0 0
    %1547 = vmatprep.subr.bf16.mxu0 0
    %1548 = vmatpush1.bf16.msra.mxu0 0
    %1549 = vmatprep.subr.bf16.mxu0 0
    %1550 = vmatpush1.bf16.msra.mxu0 0
    %1551 = vmatprep.mubr.bf16.mxu0 0
    %1552 = vmatmul.mubr.bf16.gmra.mrb[0].mxu0 %v1514
    %v1553 = vpop.f32.mrb[0].mxu0
    %v1554 = vadd.f32 0.0, %v1553
    %v1555 = vpop.f32.mrb[0].mxu0
    %v1556 = vpop.f32.mrb[0].mxu0
    %v1557 = vpop.f32.mrb[0].mxu0
    %1558 = vdwg.mxu0
    %v1560 = vsel %vm488, %v1363, 0
    %v1563 = vsel %vm979, %v1371, 0
    %1565 = vmatprep.subr.bf16.mxu0 0
    %1566 = vmatpush1.bf16.msra.mxu0 %v1563
    %1567 = vmatprep.subr.bf16.mxu0 0
    %1568 = vmatpush1.bf16.msra.mxu0 0
    %1569 = vmatprep.subr.bf16.mxu0 0
    %1570 = vmatpush1.bf16.msra.mxu0 0
    %1571 = vmatprep.subr.bf16.mxu0 0
    %1572 = vmatpush1.bf16.msra.mxu0 0
    %1573 = vmatprep.subr.bf16.mxu0 0
    %1574 = vmatpush1.bf16.msra.mxu0 0
    %1575 = vmatprep.subr.bf16.mxu0 0
    %1576 = vmatpush1.bf16.msra.mxu0 0
    %1577 = vmatprep.subr.bf16.mxu0 0
    %1578 = vmatpush1.bf16.msra.mxu0 0
    %1579 = vmatprep.subr.bf16.mxu0 0
    %1580 = vmatpush1.bf16.msra.mxu0 0
    %1581 = vmatprep.subr.bf16.mxu0 0
    %1582 = vmatpush1.bf16.msra.mxu0 0
    %1583 = vmatprep.subr.bf16.mxu0 0
    %1584 = vmatpush1.bf16.msra.mxu0 0
    %1585 = vmatprep.subr.bf16.mxu0 0
    %1586 = vmatpush1.bf16.msra.mxu0 0
    %1587 = vmatprep.subr.bf16.mxu0 0
    %1588 = vmatpush1.bf16.msra.mxu0 0
    %1589 = vmatprep.subr.bf16.mxu0 0
    %1590 = vmatpush1.bf16.msra.mxu0 0
    %1591 = vmatprep.subr.bf16.mxu0 0
    %1592 = vmatpush1.bf16.msra.mxu0 0
    %1593 = vmatprep.subr.bf16.mxu0 0
    %1594 = vmatpush1.bf16.msra.mxu0 0
    %1595 = vmatprep.subr.bf16.mxu0 0
    %1596 = vmatpush1.bf16.msra.mxu0 0
    %1597 = vmatprep.mubr.bf16.mxu0 0
    %1598 = vmatmul.mubr.bf16.gmra.mrb[0].mxu0 %v1560
    %v1599 = vpop.f32.mrb[0].mxu0
    %v1600 = vadd.f32 0.0, %v1599
    %v1601 = vpop.f32.mrb[0].mxu0
    %v1602 = vpop.f32.mrb[0].mxu0
    %v1603 = vpop.f32.mrb[0].mxu0
    %1604 = vdwg.mxu0
    %v1606 = vsel %vm488, %v1364, 0
    %v1609 = vsel %vm979, %v1372, 0
    %1611 = vmatprep.subr.bf16.mxu0 0
    %1612 = vmatpush1.bf16.msra.mxu0 %v1609
    %1613 = vmatprep.subr.bf16.mxu0 0
    %1614 = vmatpush1.bf16.msra.mxu0 0
    %1615 = vmatprep.subr.bf16.mxu0 0
    %1616 = vmatpush1.bf16.msra.mxu0 0
    %1617 = vmatprep.subr.bf16.mxu0 0
    %1618 = vmatpush1.bf16.msra.mxu0 0
    %1619 = vmatprep.subr.bf16.mxu0 0
    %1620 = vmatpush1.bf16.msra.mxu0 0
    %1621 = vmatprep.subr.bf16.mxu0 0
    %1622 = vmatpush1.bf16.msra.mxu0 0
    %1623 = vmatprep.subr.bf16.mxu0 0
    %1624 = vmatpush1.bf16.msra.mxu0 0
    %1625 = vmatprep.subr.bf16.mxu0 0
    %1626 = vmatpush1.bf16.msra.mxu0 0
    %1627 = vmatprep.subr.bf16.mxu0 0
    %1628 = vmatpush1.bf16.msra.mxu0 0
    %1629 = vmatprep.subr.bf16.mxu0 0
    %1630 = vmatpush1.bf16.msra.mxu0 0
    %1631 = vmatprep.subr.bf16.mxu0 0
    %1632 = vmatpush1.bf16.msra.mxu0 0
    %1633 = vmatprep.subr.bf16.mxu0 0
    %1634 = vmatpush1.bf16.msra.mxu0 0
    %1635 = vmatprep.subr.bf16.mxu0 0
    %1636 = vmatpush1.bf16.msra.mxu0 0
    %1637 = vmatprep.subr.bf16.mxu0 0
    %1638 = vmatpush1.bf16.msra.mxu0 0
    %1639 = vmatprep.subr.bf16.mxu0 0
    %1640 = vmatpush1.bf16.msra.mxu0 0
    %1641 = vmatprep.subr.bf16.mxu0 0
    %1642 = vmatpush1.bf16.msra.mxu0 0
    %1643 = vmatprep.mubr.bf16.mxu0 0
    %1644 = vmatmul.mubr.bf16.gmra.mrb[0].mxu0 %v1606
    %v1645 = vpop.f32.mrb[0].mxu0
    %v1646 = vadd.f32 0.0, %v1645
    %v1647 = vpop.f32.mrb[0].mxu0
    %v1648 = vpop.f32.mrb[0].mxu0
    %v1649 = vpop.f32.mrb[0].mxu0
    %1650 = vdwg.mxu0
    %v1652 = vsel %vm488, %v1365, 0
    %v1655 = vsel %vm979, %v1373, 0
    %1657 = vmatprep.subr.bf16.mxu0 0
    %1658 = vmatpush1.bf16.msra.mxu0 %v1655
    %1659 = vmatprep.subr.bf16.mxu0 0
    %1660 = vmatpush1.bf16.msra.mxu0 0
    %1661 = vmatprep.subr.bf16.mxu0 0
    %1662 = vmatpush1.bf16.msra.mxu0 0
    %1663 = vmatprep.subr.bf16.mxu0 0
    %1664 = vmatpush1.bf16.msra.mxu0 0
    %1665 = vmatprep.subr.bf16.mxu0 0
    %1666 = vmatpush1.bf16.msra.mxu0 0
    %1667 = vmatprep.subr.bf16.mxu0 0
    %1668 = vmatpush1.bf16.msra.mxu0 0
    %1669 = vmatprep.subr.bf16.mxu0 0
    %1670 = vmatpush1.bf16.msra.mxu0 0
    %1671 = vmatprep.subr.bf16.mxu0 0
    %1672 = vmatpush1.bf16.msra.mxu0 0
    %1673 = vmatprep.subr.bf16.mxu0 0
    %1674 = vmatpush1.bf16.msra.mxu0 0
    %1675 = vmatprep.subr.bf16.mxu0 0
    %1676 = vmatpush1.bf16.msra.mxu0 0
    %1677 = vmatprep.subr.bf16.mxu0 0
    %1678 = vmatpush1.bf16.msra.mxu0 0
    %1679 = vmatprep.subr.bf16.mxu0 0
    %1680 = vmatpush1.bf16.msra.mxu0 0
    %1681 = vmatprep.subr.bf16.mxu0 0
    %1682 = vmatpush1.bf16.msra.mxu0 0
    %1683 = vmatprep.subr.bf16.mxu0 0
    %1684 = vmatpush1.bf16.msra.mxu0 0
    %1685 = vmatprep.subr.bf16.mxu0 0
    %1686 = vmatpush1.bf16.msra.mxu0 0
    %1687 = vmatprep.subr.bf16.mxu0 0
    %1688 = vmatpush1.bf16.msra.mxu0 0
    %1689 = vmatprep.mubr.bf16.mxu0 0
    %1690 = vmatmul.mubr.bf16.gmra.mrb[0].mxu0 %v1652
    %v1691 = vpop.f32.mrb[0].mxu0
    %v1692 = vadd.f32 0.0, %v1691
    %v1693 = vpop.f32.mrb[0].mxu0
    %v1694 = vpop.f32.mrb[0].mxu0
    %v1695 = vpop.f32.mrb[0].mxu0
    %1696 = vdwg.mxu0
    %v1698 = vsel %vm488, %v1366, 0
    %v1701 = vsel %vm979, %v1374, 0
    %1703 = vmatprep.subr.bf16.mxu0 0
    %1704 = vmatpush1.bf16.msra.mxu0 %v1701
    %1705 = vmatprep.subr.bf16.mxu0 0
    %1706 = vmatpush1.bf16.msra.mxu0 0
    %1707 = vmatprep.subr.bf16.mxu0 0
    %1708 = vmatpush1.bf16.msra.mxu0 0
    %1709 = vmatprep.subr.bf16.mxu0 0
    %1710 = vmatpush1.bf16.msra.mxu0 0
    %1711 = vmatprep.subr.bf16.mxu0 0
    %1712 = vmatpush1.bf16.msra.mxu0 0
    %1713 = vmatprep.subr.bf16.mxu0 0
    %1714 = vmatpush1.bf16.msra.mxu0 0
    %1715 = vmatprep.subr.bf16.mxu0 0
    %1716 = vmatpush1.bf16.msra.mxu0 0
    %1717 = vmatprep.subr.bf16.mxu0 0
    %1718 = vmatpush1.bf16.msra.mxu0 0
    %1719 = vmatprep.subr.bf16.mxu0 0
    %1720 = vmatpush1.bf16.msra.mxu0 0
    %1721 = vmatprep.subr.bf16.mxu0 0
    %1722 = vmatpush1.bf16.msra.mxu0 0
    %1723 = vmatprep.subr.bf16.mxu0 0
    %1724 = vmatpush1.bf16.msra.mxu0 0
    %1725 = vmatprep.subr.bf16.mxu0 0
    %1726 = vmatpush1.bf16.msra.mxu0 0
    %1727 = vmatprep.subr.bf16.mxu0 0
    %1728 = vmatpush1.bf16.msra.mxu0 0
    %1729 = vmatprep.subr.bf16.mxu0 0
    %1730 = vmatpush1.bf16.msra.mxu0 0
    %1731 = vmatprep.subr.bf16.mxu0 0
    %1732 = vmatpush1.bf16.msra.mxu0 0
    %1733 = vmatprep.subr.bf16.mxu0 0
    %1734 = vmatpush1.bf16.msra.mxu0 0
    %1735 = vmatprep.mubr.bf16.mxu0 0
    %1736 = vmatmul.mubr.bf16.gmra.mrb[0].mxu0 %v1698
    %v1737 = vpop.f32.mrb[0].mxu0
    %v1738 = vadd.f32 0.0, %v1737
    %v1739 = vpop.f32.mrb[0].mxu0
    %v1740 = vpop.f32.mrb[0].mxu0
    %v1741 = vpop.f32.mrb[0].mxu0
    %1742 = vdwg.mxu0
    %v1743 = vsel %vm146, %v1416, 0.0
    %v1744 = vsel %vm146, %v1462, 0.0
    %v1745 = vadd.f32 %v1743, %v1744
    %v1746 = vsel %vm146, %v1508, 0.0
    %v1747 = vadd.f32 %v1745, %v1746
    %v1748 = vsel %vm146, %v1554, 0.0
    %v1749 = vadd.f32 %v1747, %v1748
    %v1750 = vsel %vm146, %v1600, 0.0
    %v1751 = vsel %vm146, %v1646, 0.0
    %v1752 = vadd.f32 %v1750, %v1751
    %v1753 = vsel %vm146, %v1692, 0.0
    %v1754 = vadd.f32 %v1752, %v1753
    %v1755 = vsel %vm146, %v1738, 0.0
    %v1756 = vadd.f32 %v1754, %v1755
    %v1757 = vlaneseq
    %v1758 = vshrl.u32 %v1757, 7
    %v1759 = vsub.s32 0, %v1758
    %v1760 = vrot.slane %v61, %v1759
    %v1761 = vadd.f32 %v1749, %v1760
    %v1762 = vadd.f32 %v1756, %v1760
    %v1763 = vadd.f32 %v57, %v1761
    %v1764 = vadd.f32 %v58, %v1762
    %v1765 = vsel %vm146, %v1763, 0.0
    %1766 = vadd.xlane.f32.xlu0 %v1765
    %v1767 = vpop.xlane.xlu0 %1766
    %v1768 = vsel %vm146, %v1764, 0.0
    %1769 = vadd.xlane.f32.xlu0 %v1768
    %v1770 = vpop.xlane.xlu0 %1769
    %v1771 = vrcp.pop 32.0
    %v1772 = vmul.f32 %v1767, %v1771
    %v1773 = vmul.f32 %v1770, %v1771
    %v1774 = vsub.f32 %v1763, %v1772
    %v1775 = vsub.f32 %v1764, %v1773
    %v1776 = vmul.f32 %v1774, %v1774
    %v1777 = vmul.f32 %v1775, %v1775
    %v1778 = vsel %vm146, %v1776, 0.0
    %1779 = vadd.xlane.f32.xlu0 %v1778
    %v1780 = vpop.xlane.xlu0 %1779
    %v1781 = vsel %vm146, %v1777, 0.0
    %1782 = vadd.xlane.f32.xlu0 %v1781
    %v1783 = vpop.xlane.xlu0 %1782
    %v1784 = vmul.f32 %v1780, %v1771
    %v1785 = vmul.f32 %v1783, %v1771
    %v1786 = vadd.f32 %v1784, 1e-05
    %v1787 = vadd.f32 %v1785, 1e-05
    %v1788 = vrsqrt.pop %v1786
    %v1789 = vrsqrt.pop %v1787
    %v1790 = vmul.f32 %v1774, %v1788
    %v1791 = vmul.f32 %v1775, %v1789
    %v1792 = vlaneseq
    %v1793 = vshrl.u32 %v1792, 7
    %v1794 = vsub.s32 0, %v1793
    %v1795 = vrot.slane %v62, %v1794
    %v1796 = vmul.f32 %v1790, %v1795
    %v1797 = vmul.f32 %v1791, %v1795
    %v1798 = vlaneseq
    %v1799 = vshrl.u32 %v1798, 7
    %v1800 = vsub.s32 0, %v1799
    %v1801 = vrot.slane %v63, %v1800
    %v1802 = vadd.f32 %v1796, %v1801
    %v1803 = vadd.f32 %v1797, %v1801
    %v1804 = vpack.c.bf16 %v1803, %v1802
    %v1805 = vpack.c.bf16 %v117, %v116
    %v1806 = vpack.c.bf16 %v119, %v118
    %v1807 = vlaneseq
    %v1808 = vshrl.u32 %v1807, 7
    %v1809 = vsub.s32 0, %v1808
    %v1810 = vrot.slane %v64, %v1809
    %v1812 = vsel %vm146, %v1804, 0
    %1814 = vmatprep.subr.bf16.mxu0 0
    %1815 = vmatpush1.bf16.msra.mxu0 %v1805
    %1816 = vmatprep.subr.bf16.mxu0 0
    %1817 = vmatpush1.bf16.msra.mxu0 %v1806
    %1818 = vmatprep.subr.bf16.mxu0 0
    %1819 = vmatpush1.bf16.msra.mxu0 0
    %1820 = vmatprep.subr.bf16.mxu0 0
    %1821 = vmatpush1.bf16.msra.mxu0 0
    %1822 = vmatprep.subr.bf16.mxu0 0
    %1823 = vmatpush1.bf16.msra.mxu0 0
    %1824 = vmatprep.subr.bf16.mxu0 0
    %1825 = vmatpush1.bf16.msra.mxu0 0
    %1826 = vmatprep.subr.bf16.mxu0 0
    %1827 = vmatpush1.bf16.msra.mxu0 0
    %1828 = vmatprep.subr.bf16.mxu0 0
    %1829 = vmatpush1.bf16.msra.mxu0 0
    %1830 = vmatprep.subr.bf16.mxu0 0
    %1831 = vmatpush1.bf16.msra.mxu0 0
    %1832 = vmatprep.subr.bf16.mxu0 0
    %1833 = vmatpush1.bf16.msra.mxu0 0
    %1834 = vmatprep.subr.bf16.mxu0 0
    %1835 = vmatpush1.bf16.msra.mxu0 0
    %1836 = vmatprep.subr.bf16.mxu0 0
    %1837 = vmatpush1.bf16.msra.mxu0 0
    %1838 = vmatprep.subr.bf16.mxu0 0
    %1839 = vmatpush1.bf16.msra.mxu0 0
    %1840 = vmatprep.subr.bf16.mxu0 0
    %1841 = vmatpush1.bf16.msra.mxu0 0
    %1842 = vmatprep.subr.bf16.mxu0 0
    %1843 = vmatpush1.bf16.msra.mxu0 0
    %1844 = vmatprep.subr.bf16.mxu0 0
    %1845 = vmatpush1.bf16.msra.mxu0 0
    %1846 = vmatprep.mubr.bf16.mxu0 0
    %1847 = vmatmul.mubr.bf16.gmra.mrb[0].mxu0 %v1812
    %v1848 = vpop.f32.mrb[0].mxu0
    %v1849 = vadd.f32 %v1810, %v1848
    %v1850 = vpop.f32.mrb[0].mxu0
    %v1851 = vpop.f32.mrb[0].mxu0
    %v1852 = vadd.f32 %v1810, %v1851
    %v1853 = vpop.f32.mrb[0].mxu0
    %1854 = vdwg.mxu0
    %v1855 = vmax.f32 %v1849, 0.0
    %v1856 = vmax.f32 %v1852, 0.0
    %v1857 = vpack.c.bf16 %v1856, %v1855
    %v1858 = vpack.c.bf16 %v121, %v120
    %v1859 = vpack.c.bf16 %v123, %v122
    %v1860 = vpack.c.bf16 %v125, %v124
    %v1861 = vpack.c.bf16 %v127, %v126
    %v1862 = vlaneseq
    %v1863 = vshrl.u32 %v1862, 7
    %v1864 = vsub.s32 0, %v1863
    %v1865 = vrot.slane %v65, %v1864
    %vm1866 = vcmask 523264
    %v1868 = vsel %vm1866, %v1857, 0
    %1870 = vmatprep.subr.bf16.mxu0 0
    %1871 = vmatpush1.bf16.msra.mxu0 %v1858
    %1872 = vmatprep.subr.bf16.mxu0 0
    %1873 = vmatpush1.bf16.msra.mxu0 %v1859
    %1874 = vmatprep.subr.bf16.mxu0 0
    %1875 = vmatpush1.bf16.msra.mxu0 %v1860
    %1876 = vmatprep.subr.bf16.mxu0 0
    %1877 = vmatpush1.bf16.msra.mxu0 %v1861
    %1878 = vmatprep.subr.bf16.mxu0 0
    %1879 = vmatpush1.bf16.msra.mxu0 0
    %1880 = vmatprep.subr.bf16.mxu0 0
    %1881 = vmatpush1.bf16.msra.mxu0 0
    %1882 = vmatprep.subr.bf16.mxu0 0
    %1883 = vmatpush1.bf16.msra.mxu0 0
    %1884 = vmatprep.subr.bf16.mxu0 0
    %1885 = vmatpush1.bf16.msra.mxu0 0
    %1886 = vmatprep.subr.bf16.mxu0 0
    %1887 = vmatpush1.bf16.msra.mxu0 0
    %1888 = vmatprep.subr.bf16.mxu0 0
    %1889 = vmatpush1.bf16.msra.mxu0 0
    %1890 = vmatprep.subr.bf16.mxu0 0
    %1891 = vmatpush1.bf16.msra.mxu0 0
    %1892 = vmatprep.subr.bf16.mxu0 0
    %1893 = vmatpush1.bf16.msra.mxu0 0
    %1894 = vmatprep.subr.bf16.mxu0 0
    %1895 = vmatpush1.bf16.msra.mxu0 0
    %1896 = vmatprep.subr.bf16.mxu0 0
    %1897 = vmatpush1.bf16.msra.mxu0 0
    %1898 = vmatprep.subr.bf16.mxu0 0
    %1899 = vmatpush1.bf16.msra.mxu0 0
    %1900 = vmatprep.subr.bf16.mxu0 0
    %1901 = vmatpush1.bf16.msra.mxu0 0
    %1902 = vmatprep.mubr.bf16.mxu0 0
    %1903 = vmatmul.mubr.bf16.gmra.mrb[0].mxu0 %v1868
    %v1904 = vpop.f32.mrb[0].mxu0
    %v1905 = vadd.f32 %v1865, %v1904
    %v1906 = vpop.f32.mrb[0].mxu0
    %v1907 = vpop.f32.mrb[0].mxu0
    %v1908 = vadd.f32 %v1865, %v1907
    %v1909 = vpop.f32.mrb[0].mxu0
    %1910 = vdwg.mxu0
    %v1911 = vadd.f32 %v1802, %v1905
    %v1912 = vadd.f32 %v1803, %v1908
    %v1913 = vsel %vm146, %v1911, 0.0
    %1914 = vadd.xlane.f32.xlu0 %v1913
    %v1915 = vpop.xlane.xlu0 %1914
    %v1916 = vsel %vm146, %v1912, 0.0
    %1917 = vadd.xlane.f32.xlu0 %v1916
    %v1918 = vpop.xlane.xlu0 %1917
    %v1919 = vmul.f32 %v1915, %v1771
    %v1920 = vmul.f32 %v1918, %v1771
    %v1921 = vsub.f32 %v1911, %v1919
    %v1922 = vsub.f32 %v1912, %v1920
    %v1923 = vmul.f32 %v1921, %v1921
    %v1924 = vmul.f32 %v1922, %v1922
    %v1925 = vsel %vm146, %v1923, 0.0
    %1926 = vadd.xlane.f32.xlu0 %v1925
    %v1927 = vpop.xlane.xlu0 %1926
    %v1928 = vsel %vm146, %v1924, 0.0
    %1929 = vadd.xlane.f32.xlu0 %v1928
    %v1930 = vpop.xlane.xlu0 %1929
    %v1931 = vmul.f32 %v1927, %v1771
    %v1932 = vmul.f32 %v1930, %v1771
    %v1933 = vadd.f32 %v1931, 1e-05
    %v1934 = vadd.f32 %v1932, 1e-05
    %v1935 = vrsqrt.pop %v1933
    %v1936 = vrsqrt.pop %v1934
    %v1937 = vmul.f32 %v1921, %v1935
    %v1938 = vmul.f32 %v1922, %v1936
    %v1939 = vlaneseq
    %v1940 = vshrl.u32 %v1939, 7
    %v1941 = vsub.s32 0, %v1940
    %v1942 = vrot.slane %v66, %v1941
    %v1943 = vmul.f32 %v1937, %v1942
    %v1944 = vmul.f32 %v1938, %v1942
    %v1945 = vlaneseq
    %v1946 = vshrl.u32 %v1945, 7
    %v1947 = vsub.s32 0, %v1946
    %v1948 = vrot.slane %v67, %v1947
    %v1949 = vadd.f32 %v1943, %v1948
    %v1950 = vadd.f32 %v1944, %v1948
    %1951 = vst.msk [vmem:[#allocation8] sm:$0xff] %vm146, %v1949
    %1952 = vst.msk [vmem:[#allocation8 + $0x8] sm:$0xff] %vm146, %v1950
    // Predicated region
    $region26: #{encoder_layer.1} parent=1 // pred_check
      _
    $region27: #{encoder_layer.1} parent=1 // pred_check_branch
      %1954 = sbr.rel (0) target = $region29
    $region28: #{encoder_layer.1} parent=1 // pred_region
      %s1956 = ssub.s32 256, 256
      %1957 = vsyncadd [#allocation4], %s1956
      %s1958 = sshll.u32 [#allocation8], 4
      %s1959 = int_to_ptr.vmem [resolvable:$true] %s1958
      %1964 = dma.vmem_to_hbm [thread:$0]  %s1959, 256, %s3, [#allocation4], 128, 128, 8
    $region29: #{encoder_layer.1} parent=1 // pred_fallthru
      _
    // Predicated region
    $region30: #{encoder_layer.1} parent=1 // pred_check
      _
    $region31: #{encoder_layer.1} parent=1 // pred_check_branch
      %1966 = sbr.rel (0) target = $region33
    $region32: #{encoder_layer.1} parent=1 // pred_region
      %1967 = dma.done [#allocation4], 256
    $region33: #{encoder_layer.1} parent=1 // pred_fallthru
      _
    %1968 = vsyncpa [#allocation3], 1
    %1969 = vsyncpa [#allocation6], 1
    %1970 = vsyncpa [#allocation4], 1

</llo_original>
